<compile_context>
chip_gen: v7x
topology: tpu7x:2x2x1
jax: 0.10.0
libtpu: 0.0.40
codegen_flags: <defaults>
</compile_context>

<pallas_src>
import functools

import jax
import jax.numpy as jnp
from jax.experimental import pallas as pl
from jax.experimental.pallas import tpu as pltpu


def _sigmoid_via_tanh(x):
    # sigmoid(x) == 0.5 * tanh(0.5 * x) + 0.5 : one EUP op instead of exp+recip.
    return 0.5 * jnp.tanh(0.5 * x) + 0.5


# ----------------------- Fused LSTM stack + Linear kernel ----------------------
def _fused_lstm_fc_kernel(n_layers, T, B, H, x_ref, *refs):
    """Fused multi-layer LSTM + final Linear on the last timestep.

    refs layout:
      [wih_t_0, whh_t_0, bias_0, ..., wih_t_{L-1}, whh_t_{L-1}, bias_{L-1},
       fc_w_t, fc_b, out_ref, seq_scratch]
    """
    w_refs = refs[:3 * n_layers]
    fcw_ref = refs[3 * n_layers]
    fcb_ref = refs[3 * n_layers + 1]
    out_ref = refs[3 * n_layers + 2]
    seq_ref = refs[3 * n_layers + 3]           # VMEM (T*B, H) inter-layer acts

    layer_in = x_ref[...]                      # (T*B, Din) f32; row t*B+b == (t, b)
    h = jnp.zeros((B, H), jnp.float32)
    for l in range(n_layers):
        wih_ref = w_refs[3 * l]
        whh_ref = w_refs[3 * l + 1]
        b_ref = w_refs[3 * l + 2]

        # Hoisted input projection: one big MXU matmul over all T*B rows.
        proj = (jnp.dot(layer_in, wih_ref[...],
                        preferred_element_type=jnp.float32)
                + b_ref[...])                  # (T*B, 4H)

        whh = whh_ref[...]                     # recurrent weights, loaded once
        h = jnp.zeros((B, H), jnp.float32)
        c = jnp.zeros((B, H), jnp.float32)
        for t in range(T):                     # static unroll over timesteps
            gates = proj[t * B:(t + 1) * B, :] + jnp.dot(
                h, whh, preferred_element_type=jnp.float32)     # (B, 4H)
            i_g = _sigmoid_via_tanh(gates[:, 0 * H:1 * H])
            f_g = _sigmoid_via_tanh(gates[:, 1 * H:2 * H])
            g_g = jnp.tanh(gates[:, 2 * H:3 * H])
            o_g = _sigmoid_via_tanh(gates[:, 3 * H:4 * H])
            c = f_g * c + i_g * g_g
            h = o_g * jnp.tanh(c)
            if l < n_layers - 1:               # next layer needs the full sequence
                seq_ref[t * B:(t + 1) * B, :] = h
        if l < n_layers - 1:
            layer_in = seq_ref[...]            # (T*B, H), stays in VMEM

    # Final Linear on the last timestep's hidden state (fused, no extra kernel).
    out_ref[...] = (jnp.dot(h, fcw_ref[...], preferred_element_type=jnp.float32)
                    + fcb_ref[...]).astype(out_ref.dtype)


# --------------------------- Parameter prep (one time) -------------------------
def prepare_params(params):
    """Transpose weights / combine biases once (not per forward call)."""
    layers = []
    for lyr in params["lstm"]:
        layers.append(dict(
            wih_t=jnp.asarray(lyr["w_ih"].T, jnp.float32),            # (Din, 4H)
            whh_t=jnp.asarray(lyr["w_hh"].T, jnp.float32),            # (H, 4H)
            bias=(lyr["b_ih"] + lyr["b_hh"]).reshape(1, -1).astype(jnp.float32),
        ))
    return dict(
        layers=layers,
        fc_w_t=jnp.asarray(params["fc_w"].T, jnp.float32),            # (H, O)
        fc_b=params["fc_b"].reshape(1, -1).astype(jnp.float32),       # (1, O)
    )


# ------------------------------- Forward wrapper -------------------------------
def lstm_model_forward(x, prepped):
    """x: (T, B, input_dim) -> (B, output_dim). Single fused pallas_call."""
    T, B, D = x.shape
    layers = prepped["layers"]
    n_layers = len(layers)
    H = layers[0]["whh_t"].shape[0]
    O = prepped["fc_w_t"].shape[1]

    x2d = x.reshape(T * B, D).astype(jnp.float32)     # row t*B+b == timestep t, batch b

    args = [x2d]
    in_specs = [pl.BlockSpec((T * B, D), lambda i: (0, 0))]
    for lyr in layers:
        din = lyr["wih_t"].shape[0]
        args += [lyr["wih_t"], lyr["whh_t"], lyr["bias"]]
        in_specs += [
            pl.BlockSpec((din, 4 * H), lambda i: (0, 0)),
            pl.BlockSpec((H, 4 * H), lambda i: (0, 0)),
            pl.BlockSpec((1, 4 * H), lambda i: (0, 0)),
        ]
    args += [prepped["fc_w_t"], prepped["fc_b"]]
    in_specs += [
        pl.BlockSpec((H, O), lambda i: (0, 0)),
        pl.BlockSpec((1, O), lambda i: (0, 0)),
    ]

    kernel = functools.partial(_fused_lstm_fc_kernel, n_layers, T, B, H)

    return pl.pallas_call(
        kernel,
        out_shape=jax.ShapeDtypeStruct((B, O), jnp.float32),
        grid=(1,),
        in_specs=in_specs,
        out_specs=pl.BlockSpec((B, O), lambda i: (0, 0)),
        scratch_shapes=[pltpu.VMEM((T * B, H), jnp.float32)],
        compiler_params=pltpu.CompilerParams(
            dimension_semantics=("arbitrary",)),
    )(*args)


# ------------------------- Deterministic parameter init ------------------------
def xavier_uniform(key, shape):
    fan_out, fan_in = shape
    limit = (6.0 / (fan_in + fan_out)) ** 0.5
    return jax.random.uniform(key, shape, jnp.float32, -limit, limit)


def init_params(key, input_dim, hidden_dim, output_dim, n_layers):
    layers = []
    for l in range(n_layers):
        in_dim = input_dim if l == 0 else hidden_dim
        key, k1, k2 = jax.random.split(key, 3)
        layers.append(dict(
            w_ih=xavier_uniform(k1, (4 * hidden_dim, in_dim)),
            w_hh=xavier_uniform(k2, (4 * hidden_dim, hidden_dim)),
            b_ih=jnp.zeros((4 * hidden_dim,), jnp.float32),
            b_hh=jnp.zeros((4 * hidden_dim,), jnp.float32),
        ))
    key, kw, kb = jax.random.split(key, 3)
    bound = 1.0 / (hidden_dim ** 0.5)
    fc_w = jax.random.uniform(kw, (output_dim, hidden_dim), jnp.float32, -bound, bound)
    fc_b = jax.random.uniform(kb, (output_dim,), jnp.float32, -bound, bound)
    return dict(lstm=layers, fc_w=fc_w, fc_b=fc_b)


# ------------------------------ Pure-JAX reference ------------------------------
def reference_forward(x, params):
    h_seq = x
    for layer in params["lstm"]:
        T, B, _ = h_seq.shape
        H = layer["w_hh"].shape[1]
        wih_t, whh_t = layer["w_ih"].T, layer["w_hh"].T
        bias = layer["b_ih"] + layer["b_hh"]

        def step(carry, x_t):
            h, c = carry
            g = x_t @ wih_t + h @ whh_t + bias
            i, f, gg, o = jnp.split(g, 4, axis=-1)
            c = jax.nn.sigmoid(f) * c + jax.nn.sigmoid(i) * jnp.tanh(gg)
            h = jax.nn.sigmoid(o) * jnp.tanh(c)
            return (h, c), h

        init = (jnp.zeros((B, H)), jnp.zeros((B, H)))
        _, h_seq = jax.lax.scan(step, init, h_seq)
    return h_seq[-1] @ params["fc_w"].T + params["fc_b"]


if __name__ == "__main__":
    T, B = 8, 2
    input_dim, hidden_dim, output_dim, n_layers = 16, 32, 8, 2

    key = jax.random.PRNGKey(0)
    k_x, k_p = jax.random.split(key)
    x = jax.random.normal(k_x, (T, B, input_dim), jnp.float32)
    params = init_params(k_p, input_dim, hidden_dim, output_dim, n_layers)

    prepped = prepare_params(params)          # one-time weight transpose / bias merge
    out = lstm_model_forward(x, prepped)
    jax.block_until_ready(out)

    ref = reference_forward(x, params)
    assert out.shape == (B, output_dim)
    assert jnp.allclose(out, ref, atol=1e-4, rtol=1e-4)

    print("KERNEL_OK")
</pallas_src>

<mosaic_0001>
module attributes {stable_mosaic.version = 11 : i64} {
  func.func @_fused_lstm_fc_kernel(%arg0: i32, %arg1: memref<16x16xf32, #tpu.memory_space<vmem>>, %arg2: memref<16x128xf32, #tpu.memory_space<vmem>>, %arg3: memref<32x128xf32, #tpu.memory_space<vmem>>, %arg4: memref<1x128xf32, #tpu.memory_space<vmem>>, %arg5: memref<32x128xf32, #tpu.memory_space<vmem>>, %arg6: memref<32x128xf32, #tpu.memory_space<vmem>>, %arg7: memref<1x128xf32, #tpu.memory_space<vmem>>, %arg8: memref<32x8xf32, #tpu.memory_space<vmem>>, %arg9: memref<1x8xf32, #tpu.memory_space<vmem>>, %arg10: memref<2x8xf32, #tpu.memory_space<vmem>>, %arg11: memref<16x32xf32, #tpu.memory_space<vmem>>) attributes {dimension_semantics = [#tpu.dimension_semantics<arbitrary>], iteration_bounds = array<i64: 1>, scalar_prefetch = 0 : i64, scratch_operands = 1 : i64, tpu.core_type = #tpu.core_type<tc>, window_params = [{pipeline_mode = #tpu.pipeline_mode<synchronous>, transform_indices = @transform_0, window_bounds = array<i64: 16, 16>}, {pipeline_mode = #tpu.pipeline_mode<synchronous>, transform_indices = @transform_1, window_bounds = array<i64: 16, 128>}, {pipeline_mode = #tpu.pipeline_mode<synchronous>, transform_indices = @transform_2, window_bounds = array<i64: 32, 128>}, {pipeline_mode = #tpu.pipeline_mode<synchronous>, transform_indices = @transform_3, window_bounds = array<i64: 1, 128>}, {pipeline_mode = #tpu.pipeline_mode<synchronous>, transform_indices = @transform_4, window_bounds = array<i64: 32, 128>}, {pipeline_mode = #tpu.pipeline_mode<synchronous>, transform_indices = @transform_5, window_bounds = array<i64: 32, 128>}, {pipeline_mode = #tpu.pipeline_mode<synchronous>, transform_indices = @transform_6, window_bounds = array<i64: 1, 128>}, {pipeline_mode = #tpu.pipeline_mode<synchronous>, transform_indices = @transform_7, window_bounds = array<i64: 32, 8>}, {pipeline_mode = #tpu.pipeline_mode<synchronous>, transform_indices = @transform_8, window_bounds = array<i64: 1, 8>}, {pipeline_mode = #tpu.pipeline_mode<synchronous>, transform_indices = @transform_9, window_bounds = array<i64: 2, 8>}]} {
    %c0 = arith.constant 0 : index
    %c0_0 = arith.constant 0 : index
    %0 = vector.load %arg1[%c0, %c0_0] : memref<16x16xf32, #tpu.memory_space<vmem>>, vector<16x16xf32>
    %c0_1 = arith.constant 0 : index
    %c0_2 = arith.constant 0 : index
    %1 = vector.load %arg2[%c0_1, %c0_2] : memref<16x128xf32, #tpu.memory_space<vmem>>, vector<16x128xf32>
    %cst = arith.constant dense<0.000000e+00> : vector<16x128xf32>
    %2 = tpu.matmul %0, %1, %cst {dimension_numbers = #tpu.dot_dimension_numbers<[1], [0], [0], [1], [0, 0, 1, 1], [], []>} : vector<16x16xf32>, vector<16x128xf32>, vector<16x128xf32> -> vector<16x128xf32>
    %c0_3 = arith.constant 0 : index
    %c0_4 = arith.constant 0 : index
    %3 = vector.load %arg4[%c0_3, %c0_4] : memref<1x128xf32, #tpu.memory_space<vmem>>, vector<1x128xf32>
    %4 = vector.broadcast %3 : vector<1x128xf32> to vector<16x128xf32>
    %5 = arith.addf %2, %4 : vector<16x128xf32>
    %c0_5 = arith.constant 0 : index
    %c0_6 = arith.constant 0 : index
    %6 = vector.load %arg3[%c0_5, %c0_6] : memref<32x128xf32, #tpu.memory_space<vmem>>, vector<32x128xf32>
    %cst_7 = arith.constant 0.000000e+00 : f32
    %7 = vector.broadcast %cst_7 : f32 to vector<2x32xf32>
    %cst_8 = arith.constant 0.000000e+00 : f32
    %8 = vector.broadcast %cst_8 : f32 to vector<2x32xf32>
    %9 = vector.extract_strided_slice %5 {offsets = [0, 0], sizes = [2, 128], strides = [1, 1]} : vector<16x128xf32> to vector<2x128xf32>
    %cst_9 = arith.constant dense<0.000000e+00> : vector<2x128xf32>
    %10 = tpu.matmul %7, %6, %cst_9 {dimension_numbers = #tpu.dot_dimension_numbers<[1], [0], [0], [1], [0, 0, 1, 1], [], []>} : vector<2x32xf32>, vector<32x128xf32>, vector<2x128xf32> -> vector<2x128xf32>
    %11 = arith.addf %9, %10 : vector<2x128xf32>
    %12 = vector.extract_strided_slice %11 {offsets = [0, 0], sizes = [2, 32], strides = [1, 1]} : vector<2x128xf32> to vector<2x32xf32>
    %cst_10 = arith.constant 5.000000e-01 : f32
    %13 = vector.broadcast %cst_10 : f32 to vector<2x32xf32>
    %14 = arith.mulf %13, %12 : vector<2x32xf32>
    %15 = math.tanh %14 : vector<2x32xf32>
    %cst_11 = arith.constant 5.000000e-01 : f32
    %16 = vector.broadcast %cst_11 : f32 to vector<2x32xf32>
    %17 = arith.mulf %16, %15 : vector<2x32xf32>
    %cst_12 = arith.constant 5.000000e-01 : f32
    %18 = vector.broadcast %cst_12 : f32 to vector<2x32xf32>
    %19 = arith.addf %17, %18 : vector<2x32xf32>
    %20 = vector.extract_strided_slice %11 {offsets = [0, 32], sizes = [2, 32], strides = [1, 1]} : vector<2x128xf32> to vector<2x32xf32>
    %cst_13 = arith.constant 5.000000e-01 : f32
    %21 = vector.broadcast %cst_13 : f32 to vector<2x32xf32>
    %22 = arith.mulf %21, %20 : vector<2x32xf32>
    %23 = math.tanh %22 : vector<2x32xf32>
    %cst_14 = arith.constant 5.000000e-01 : f32
    %24 = vector.broadcast %cst_14 : f32 to vector<2x32xf32>
    %25 = arith.mulf %24, %23 : vector<2x32xf32>
    %cst_15 = arith.constant 5.000000e-01 : f32
    %26 = vector.broadcast %cst_15 : f32 to vector<2x32xf32>
    %27 = arith.addf %25, %26 : vector<2x32xf32>
    %28 = vector.extract_strided_slice %11 {offsets = [0, 64], sizes = [2, 32], strides = [1, 1]} : vector<2x128xf32> to vector<2x32xf32>
    %29 = math.tanh %28 : vector<2x32xf32>
    %30 = vector.extract_strided_slice %11 {offsets = [0, 96], sizes = [2, 32], strides = [1, 1]} : vector<2x128xf32> to vector<2x32xf32>
    %cst_16 = arith.constant 5.000000e-01 : f32
    %31 = vector.broadcast %cst_16 : f32 to vector<2x32xf32>
    %32 = arith.mulf %31, %30 : vector<2x32xf32>
    %33 = math.tanh %32 : vector<2x32xf32>
    %cst_17 = arith.constant 5.000000e-01 : f32
    %34 = vector.broadcast %cst_17 : f32 to vector<2x32xf32>
    %35 = arith.mulf %34, %33 : vector<2x32xf32>
    %cst_18 = arith.constant 5.000000e-01 : f32
    %36 = vector.broadcast %cst_18 : f32 to vector<2x32xf32>
    %37 = arith.addf %35, %36 : vector<2x32xf32>
    %38 = arith.mulf %27, %8 : vector<2x32xf32>
    %39 = arith.mulf %19, %29 : vector<2x32xf32>
    %40 = arith.addf %38, %39 : vector<2x32xf32>
    %41 = math.tanh %40 : vector<2x32xf32>
    %42 = arith.mulf %37, %41 : vector<2x32xf32>
    %c0_19 = arith.constant 0 : index
    %c0_20 = arith.constant 0 : index
    %43 = vector.load %arg11[%c0_19, %c0_20] : memref<16x32xf32, #tpu.memory_space<vmem>>, vector<2x32xf32>
    tpu.vector_store %arg11[%c0_19, %c0_20], %42 {strides = array<i32>} : memref<16x32xf32, #tpu.memory_space<vmem>>, vector<2x32xf32>,
    %44 = vector.extract_strided_slice %5 {offsets = [2, 0], sizes = [2, 128], strides = [1, 1]} : vector<16x128xf32> to vector<2x128xf32>
    %cst_21 = arith.constant dense<0.000000e+00> : vector<2x128xf32>
    %45 = tpu.matmul %42, %6, %cst_21 {dimension_numbers = #tpu.dot_dimension_numbers<[1], [0], [0], [1], [0, 0, 1, 1], [], []>} : vector<2x32xf32>, vector<32x128xf32>, vector<2x128xf32> -> vector<2x128xf32>
    %46 = arith.addf %44, %45 : vector<2x128xf32>
    %47 = vector.extract_strided_slice %46 {offsets = [0, 0], sizes = [2, 32], strides = [1, 1]} : vector<2x128xf32> to vector<2x32xf32>
    %cst_22 = arith.constant 5.000000e-01 : f32
    %48 = vector.broadcast %cst_22 : f32 to vector<2x32xf32>
    %49 = arith.mulf %48, %47 : vector<2x32xf32>
    %50 = math.tanh %49 : vector<2x32xf32>
    %cst_23 = arith.constant 5.000000e-01 : f32
    %51 = vector.broadcast %cst_23 : f32 to vector<2x32xf32>
    %52 = arith.mulf %51, %50 : vector<2x32xf32>
    %cst_24 = arith.constant 5.000000e-01 : f32
    %53 = vector.broadcast %cst_24 : f32 to vector<2x32xf32>
    %54 = arith.addf %52, %53 : vector<2x32xf32>
    %55 = vector.extract_strided_slice %46 {offsets = [0, 32], sizes = [2, 32], strides = [1, 1]} : vector<2x128xf32> to vector<2x32xf32>
    %cst_25 = arith.constant 5.000000e-01 : f32
    %56 = vector.broadcast %cst_25 : f32 to vector<2x32xf32>
    %57 = arith.mulf %56, %55 : vector<2x32xf32>
    %58 = math.tanh %57 : vector<2x32xf32>
    %cst_26 = arith.constant 5.000000e-01 : f32
    %59 = vector.broadcast %cst_26 : f32 to vector<2x32xf32>
    %60 = arith.mulf %59, %58 : vector<2x32xf32>
    %cst_27 = arith.constant 5.000000e-01 : f32
    %61 = vector.broadcast %cst_27 : f32 to vector<2x32xf32>
    %62 = arith.addf %60, %61 : vector<2x32xf32>
    %63 = vector.extract_strided_slice %46 {offsets = [0, 64], sizes = [2, 32], strides = [1, 1]} : vector<2x128xf32> to vector<2x32xf32>
    %64 = math.tanh %63 : vector<2x32xf32>
    %65 = vector.extract_strided_slice %46 {offsets = [0, 96], sizes = [2, 32], strides = [1, 1]} : vector<2x128xf32> to vector<2x32xf32>
    %cst_28 = arith.constant 5.000000e-01 : f32
    %66 = vector.broadcast %cst_28 : f32 to vector<2x32xf32>
    %67 = arith.mulf %66, %65 : vector<2x32xf32>
    %68 = math.tanh %67 : vector<2x32xf32>
    %cst_29 = arith.constant 5.000000e-01 : f32
    %69 = vector.broadcast %cst_29 : f32 to vector<2x32xf32>
    %70 = arith.mulf %69, %68 : vector<2x32xf32>
    %cst_30 = arith.constant 5.000000e-01 : f32
    %71 = vector.broadcast %cst_30 : f32 to vector<2x32xf32>
    %72 = arith.addf %70, %71 : vector<2x32xf32>
    %73 = arith.mulf %62, %40 : vector<2x32xf32>
    %74 = arith.mulf %54, %64 : vector<2x32xf32>
    %75 = arith.addf %73, %74 : vector<2x32xf32>
    %76 = math.tanh %75 : vector<2x32xf32>
    %77 = arith.mulf %72, %76 : vector<2x32xf32>
    %c2 = arith.constant 2 : index
    %c0_31 = arith.constant 0 : index
    %78 = vector.load %arg11[%c2, %c0_31] : memref<16x32xf32, #tpu.memory_space<vmem>>, vector<2x32xf32>
    tpu.vector_store %arg11[%c2, %c0_31], %77 {strides = array<i32>} : memref<16x32xf32, #tpu.memory_space<vmem>>, vector<2x32xf32>,
    %79 = vector.extract_strided_slice %5 {offsets = [4, 0], sizes = [2, 128], strides = [1, 1]} : vector<16x128xf32> to vector<2x128xf32>
    %cst_32 = arith.constant dense<0.000000e+00> : vector<2x128xf32>
    %80 = tpu.matmul %77, %6, %cst_32 {dimension_numbers = #tpu.dot_dimension_numbers<[1], [0], [0], [1], [0, 0, 1, 1], [], []>} : vector<2x32xf32>, vector<32x128xf32>, vector<2x128xf32> -> vector<2x128xf32>
    %81 = arith.addf %79, %80 : vector<2x128xf32>
    %82 = vector.extract_strided_slice %81 {offsets = [0, 0], sizes = [2, 32], strides = [1, 1]} : vector<2x128xf32> to vector<2x32xf32>
    %cst_33 = arith.constant 5.000000e-01 : f32
    %83 = vector.broadcast %cst_33 : f32 to vector<2x32xf32>
    %84 = arith.mulf %83, %82 : vector<2x32xf32>
    %85 = math.tanh %84 : vector<2x32xf32>
    %cst_34 = arith.constant 5.000000e-01 : f32
    %86 = vector.broadcast %cst_34 : f32 to vector<2x32xf32>
    %87 = arith.mulf %86, %85 : vector<2x32xf32>
    %cst_35 = arith.constant 5.000000e-01 : f32
    %88 = vector.broadcast %cst_35 : f32 to vector<2x32xf32>
    %89 = arith.addf %87, %88 : vector<2x32xf32>
    %90 = vector.extract_strided_slice %81 {offsets = [0, 32], sizes = [2, 32], strides = [1, 1]} : vector<2x128xf32> to vector<2x32xf32>
    %cst_36 = arith.constant 5.000000e-01 : f32
    %91 = vector.broadcast %cst_36 : f32 to vector<2x32xf32>
    %92 = arith.mulf %91, %90 : vector<2x32xf32>
    %93 = math.tanh %92 : vector<2x32xf32>
    %cst_37 = arith.constant 5.000000e-01 : f32
    %94 = vector.broadcast %cst_37 : f32 to vector<2x32xf32>
    %95 = arith.mulf %94, %93 : vector<2x32xf32>
    %cst_38 = arith.constant 5.000000e-01 : f32
    %96 = vector.broadcast %cst_38 : f32 to vector<2x32xf32>
    %97 = arith.addf %95, %96 : vector<2x32xf32>
    %98 = vector.extract_strided_slice %81 {offsets = [0, 64], sizes = [2, 32], strides = [1, 1]} : vector<2x128xf32> to vector<2x32xf32>
    %99 = math.tanh %98 : vector<2x32xf32>
    %100 = vector.extract_strided_slice %81 {offsets = [0, 96], sizes = [2, 32], strides = [1, 1]} : vector<2x128xf32> to vector<2x32xf32>
    %cst_39 = arith.constant 5.000000e-01 : f32
    %101 = vector.broadcast %cst_39 : f32 to vector<2x32xf32>
    %102 = arith.mulf %101, %100 : vector<2x32xf32>
    %103 = math.tanh %102 : vector<2x32xf32>
    %cst_40 = arith.constant 5.000000e-01 : f32
    %104 = vector.broadcast %cst_40 : f32 to vector<2x32xf32>
    %105 = arith.mulf %104, %103 : vector<2x32xf32>
    %cst_41 = arith.constant 5.000000e-01 : f32
    %106 = vector.broadcast %cst_41 : f32 to vector<2x32xf32>
    %107 = arith.addf %105, %106 : vector<2x32xf32>
    %108 = arith.mulf %97, %75 : vector<2x32xf32>
    %109 = arith.mulf %89, %99 : vector<2x32xf32>
    %110 = arith.addf %108, %109 : vector<2x32xf32>
    %111 = math.tanh %110 : vector<2x32xf32>
    %112 = arith.mulf %107, %111 : vector<2x32xf32>
    %c4 = arith.constant 4 : index
    %c0_42 = arith.constant 0 : index
    %113 = vector.load %arg11[%c4, %c0_42] : memref<16x32xf32, #tpu.memory_space<vmem>>, vector<2x32xf32>
    tpu.vector_store %arg11[%c4, %c0_42], %112 {strides = array<i32>} : memref<16x32xf32, #tpu.memory_space<vmem>>, vector<2x32xf32>,
    %114 = vector.extract_strided_slice %5 {offsets = [6, 0], sizes = [2, 128], strides = [1, 1]} : vector<16x128xf32> to vector<2x128xf32>
    %cst_43 = arith.constant dense<0.000000e+00> : vector<2x128xf32>
    %115 = tpu.matmul %112, %6, %cst_43 {dimension_numbers = #tpu.dot_dimension_numbers<[1], [0], [0], [1], [0, 0, 1, 1], [], []>} : vector<2x32xf32>, vector<32x128xf32>, vector<2x128xf32> -> vector<2x128xf32>
    %116 = arith.addf %114, %115 : vector<2x128xf32>
    %117 = vector.extract_strided_slice %116 {offsets = [0, 0], sizes = [2, 32], strides = [1, 1]} : vector<2x128xf32> to vector<2x32xf32>
    %cst_44 = arith.constant 5.000000e-01 : f32
    %118 = vector.broadcast %cst_44 : f32 to vector<2x32xf32>
    %119 = arith.mulf %118, %117 : vector<2x32xf32>
    %120 = math.tanh %119 : vector<2x32xf32>
    %cst_45 = arith.constant 5.000000e-01 : f32
    %121 = vector.broadcast %cst_45 : f32 to vector<2x32xf32>
    %122 = arith.mulf %121, %120 : vector<2x32xf32>
    %cst_46 = arith.constant 5.000000e-01 : f32
    %123 = vector.broadcast %cst_46 : f32 to vector<2x32xf32>
    %124 = arith.addf %122, %123 : vector<2x32xf32>
    %125 = vector.extract_strided_slice %116 {offsets = [0, 32], sizes = [2, 32], strides = [1, 1]} : vector<2x128xf32> to vector<2x32xf32>
    %cst_47 = arith.constant 5.000000e-01 : f32
    %126 = vector.broadcast %cst_47 : f32 to vector<2x32xf32>
    %127 = arith.mulf %126, %125 : vector<2x32xf32>
    %128 = math.tanh %127 : vector<2x32xf32>
    %cst_48 = arith.constant 5.000000e-01 : f32
    %129 = vector.broadcast %cst_48 : f32 to vector<2x32xf32>
    %130 = arith.mulf %129, %128 : vector<2x32xf32>
    %cst_49 = arith.constant 5.000000e-01 : f32
    %131 = vector.broadcast %cst_49 : f32 to vector<2x32xf32>
    %132 = arith.addf %130, %131 : vector<2x32xf32>
    %133 = vector.extract_strided_slice %116 {offsets = [0, 64], sizes = [2, 32], strides = [1, 1]} : vector<2x128xf32> to vector<2x32xf32>
    %134 = math.tanh %133 : vector<2x32xf32>
    %135 = vector.extract_strided_slice %116 {offsets = [0, 96], sizes = [2, 32], strides = [1, 1]} : vector<2x128xf32> to vector<2x32xf32>
    %cst_50 = arith.constant 5.000000e-01 : f32
    %136 = vector.broadcast %cst_50 : f32 to vector<2x32xf32>
    %137 = arith.mulf %136, %135 : vector<2x32xf32>
    %138 = math.tanh %137 : vector<2x32xf32>
    %cst_51 = arith.constant 5.000000e-01 : f32
    %139 = vector.broadcast %cst_51 : f32 to vector<2x32xf32>
    %140 = arith.mulf %139, %138 : vector<2x32xf32>
    %cst_52 = arith.constant 5.000000e-01 : f32
    %141 = vector.broadcast %cst_52 : f32 to vector<2x32xf32>
    %142 = arith.addf %140, %141 : vector<2x32xf32>
    %143 = arith.mulf %132, %110 : vector<2x32xf32>
    %144 = arith.mulf %124, %134 : vector<2x32xf32>
    %145 = arith.addf %143, %144 : vector<2x32xf32>
    %146 = math.tanh %145 : vector<2x32xf32>
    %147 = arith.mulf %142, %146 : vector<2x32xf32>
    %c6 = arith.constant 6 : index
    %c0_53 = arith.constant 0 : index
    %148 = vector.load %arg11[%c6, %c0_53] : memref<16x32xf32, #tpu.memory_space<vmem>>, vector<2x32xf32>
    tpu.vector_store %arg11[%c6, %c0_53], %147 {strides = array<i32>} : memref<16x32xf32, #tpu.memory_space<vmem>>, vector<2x32xf32>,
    %149 = vector.extract_strided_slice %5 {offsets = [8, 0], sizes = [2, 128], strides = [1, 1]} : vector<16x128xf32> to vector<2x128xf32>
    %cst_54 = arith.constant dense<0.000000e+00> : vector<2x128xf32>
    %150 = tpu.matmul %147, %6, %cst_54 {dimension_numbers = #tpu.dot_dimension_numbers<[1], [0], [0], [1], [0, 0, 1, 1], [], []>} : vector<2x32xf32>, vector<32x128xf32>, vector<2x128xf32> -> vector<2x128xf32>
    %151 = arith.addf %149, %150 : vector<2x128xf32>
    %152 = vector.extract_strided_slice %151 {offsets = [0, 0], sizes = [2, 32], strides = [1, 1]} : vector<2x128xf32> to vector<2x32xf32>
    %cst_55 = arith.constant 5.000000e-01 : f32
    %153 = vector.broadcast %cst_55 : f32 to vector<2x32xf32>
    %154 = arith.mulf %153, %152 : vector<2x32xf32>
    %155 = math.tanh %154 : vector<2x32xf32>
    %cst_56 = arith.constant 5.000000e-01 : f32
    %156 = vector.broadcast %cst_56 : f32 to vector<2x32xf32>
    %157 = arith.mulf %156, %155 : vector<2x32xf32>
    %cst_57 = arith.constant 5.000000e-01 : f32
    %158 = vector.broadcast %cst_57 : f32 to vector<2x32xf32>
    %159 = arith.addf %157, %158 : vector<2x32xf32>
    %160 = vector.extract_strided_slice %151 {offsets = [0, 32], sizes = [2, 32], strides = [1, 1]} : vector<2x128xf32> to vector<2x32xf32>
    %cst_58 = arith.constant 5.000000e-01 : f32
    %161 = vector.broadcast %cst_58 : f32 to vector<2x32xf32>
    %162 = arith.mulf %161, %160 : vector<2x32xf32>
    %163 = math.tanh %162 : vector<2x32xf32>
    %cst_59 = arith.constant 5.000000e-01 : f32
    %164 = vector.broadcast %cst_59 : f32 to vector<2x32xf32>
    %165 = arith.mulf %164, %163 : vector<2x32xf32>
    %cst_60 = arith.constant 5.000000e-01 : f32
    %166 = vector.broadcast %cst_60 : f32 to vector<2x32xf32>
    %167 = arith.addf %165, %166 : vector<2x32xf32>
    %168 = vector.extract_strided_slice %151 {offsets = [0, 64], sizes = [2, 32], strides = [1, 1]} : vector<2x128xf32> to vector<2x32xf32>
    %169 = math.tanh %168 : vector<2x32xf32>
    %170 = vector.extract_strided_slice %151 {offsets = [0, 96], sizes = [2, 32], strides = [1, 1]} : vector<2x128xf32> to vector<2x32xf32>
    %cst_61 = arith.constant 5.000000e-01 : f32
    %171 = vector.broadcast %cst_61 : f32 to vector<2x32xf32>
    %172 = arith.mulf %171, %170 : vector<2x32xf32>
    %173 = math.tanh %172 : vector<2x32xf32>
    %cst_62 = arith.constant 5.000000e-01 : f32
    %174 = vector.broadcast %cst_62 : f32 to vector<2x32xf32>
    %175 = arith.mulf %174, %173 : vector<2x32xf32>
    %cst_63 = arith.constant 5.000000e-01 : f32
    %176 = vector.broadcast %cst_63 : f32 to vector<2x32xf32>
    %177 = arith.addf %175, %176 : vector<2x32xf32>
    %178 = arith.mulf %167, %145 : vector<2x32xf32>
    %179 = arith.mulf %159, %169 : vector<2x32xf32>
    %180 = arith.addf %178, %179 : vector<2x32xf32>
    %181 = math.tanh %180 : vector<2x32xf32>
    %182 = arith.mulf %177, %181 : vector<2x32xf32>
    %c8 = arith.constant 8 : index
    %c0_64 = arith.constant 0 : index
    %183 = vector.load %arg11[%c8, %c0_64] : memref<16x32xf32, #tpu.memory_space<vmem>>, vector<2x32xf32>
    tpu.vector_store %arg11[%c8, %c0_64], %182 {strides = array<i32>} : memref<16x32xf32, #tpu.memory_space<vmem>>, vector<2x32xf32>,
    %184 = vector.extract_strided_slice %5 {offsets = [10, 0], sizes = [2, 128], strides = [1, 1]} : vector<16x128xf32> to vector<2x128xf32>
    %cst_65 = arith.constant dense<0.000000e+00> : vector<2x128xf32>
    %185 = tpu.matmul %182, %6, %cst_65 {dimension_numbers = #tpu.dot_dimension_numbers<[1], [0], [0], [1], [0, 0, 1, 1], [], []>} : vector<2x32xf32>, vector<32x128xf32>, vector<2x128xf32> -> vector<2x128xf32>
    %186 = arith.addf %184, %185 : vector<2x128xf32>
    %187 = vector.extract_strided_slice %186 {offsets = [0, 0], sizes = [2, 32], strides = [1, 1]} : vector<2x128xf32> to vector<2x32xf32>
    %cst_66 = arith.constant 5.000000e-01 : f32
    %188 = vector.broadcast %cst_66 : f32 to vector<2x32xf32>
    %189 = arith.mulf %188, %187 : vector<2x32xf32>
    %190 = math.tanh %189 : vector<2x32xf32>
    %cst_67 = arith.constant 5.000000e-01 : f32
    %191 = vector.broadcast %cst_67 : f32 to vector<2x32xf32>
    %192 = arith.mulf %191, %190 : vector<2x32xf32>
    %cst_68 = arith.constant 5.000000e-01 : f32
    %193 = vector.broadcast %cst_68 : f32 to vector<2x32xf32>
    %194 = arith.addf %192, %193 : vector<2x32xf32>
    %195 = vector.extract_strided_slice %186 {offsets = [0, 32], sizes = [2, 32], strides = [1, 1]} : vector<2x128xf32> to vector<2x32xf32>
    %cst_69 = arith.constant 5.000000e-01 : f32
    %196 = vector.broadcast %cst_69 : f32 to vector<2x32xf32>
    %197 = arith.mulf %196, %195 : vector<2x32xf32>
    %198 = math.tanh %197 : vector<2x32xf32>
    %cst_70 = arith.constant 5.000000e-01 : f32
    %199 = vector.broadcast %cst_70 : f32 to vector<2x32xf32>
    %200 = arith.mulf %199, %198 : vector<2x32xf32>
    %cst_71 = arith.constant 5.000000e-01 : f32
    %201 = vector.broadcast %cst_71 : f32 to vector<2x32xf32>
    %202 = arith.addf %200, %201 : vector<2x32xf32>
    %203 = vector.extract_strided_slice %186 {offsets = [0, 64], sizes = [2, 32], strides = [1, 1]} : vector<2x128xf32> to vector<2x32xf32>
    %204 = math.tanh %203 : vector<2x32xf32>
    %205 = vector.extract_strided_slice %186 {offsets = [0, 96], sizes = [2, 32], strides = [1, 1]} : vector<2x128xf32> to vector<2x32xf32>
    %cst_72 = arith.constant 5.000000e-01 : f32
    %206 = vector.broadcast %cst_72 : f32 to vector<2x32xf32>
    %207 = arith.mulf %206, %205 : vector<2x32xf32>
    %208 = math.tanh %207 : vector<2x32xf32>
    %cst_73 = arith.constant 5.000000e-01 : f32
    %209 = vector.broadcast %cst_73 : f32 to vector<2x32xf32>
    %210 = arith.mulf %209, %208 : vector<2x32xf32>
    %cst_74 = arith.constant 5.000000e-01 : f32
    %211 = vector.broadcast %cst_74 : f32 to vector<2x32xf32>
    %212 = arith.addf %210, %211 : vector<2x32xf32>
    %213 = arith.mulf %202, %180 : vector<2x32xf32>
    %214 = arith.mulf %194, %204 : vector<2x32xf32>
    %215 = arith.addf %213, %214 : vector<2x32xf32>
    %216 = math.tanh %215 : vector<2x32xf32>
    %217 = arith.mulf %212, %216 : vector<2x32xf32>
    %c10 = arith.constant 10 : index
    %c0_75 = arith.constant 0 : index
    %218 = vector.load %arg11[%c10, %c0_75] : memref<16x32xf32, #tpu.memory_space<vmem>>, vector<2x32xf32>
    tpu.vector_store %arg11[%c10, %c0_75], %217 {strides = array<i32>} : memref<16x32xf32, #tpu.memory_space<vmem>>, vector<2x32xf32>,
    %219 = vector.extract_strided_slice %5 {offsets = [12, 0], sizes = [2, 128], strides = [1, 1]} : vector<16x128xf32> to vector<2x128xf32>
    %cst_76 = arith.constant dense<0.000000e+00> : vector<2x128xf32>
    %220 = tpu.matmul %217, %6, %cst_76 {dimension_numbers = #tpu.dot_dimension_numbers<[1], [0], [0], [1], [0, 0, 1, 1], [], []>} : vector<2x32xf32>, vector<32x128xf32>, vector<2x128xf32> -> vector<2x128xf32>
    %221 = arith.addf %219, %220 : vector<2x128xf32>
    %222 = vector.extract_strided_slice %221 {offsets = [0, 0], sizes = [2, 32], strides = [1, 1]} : vector<2x128xf32> to vector<2x32xf32>
    %cst_77 = arith.constant 5.000000e-01 : f32
    %223 = vector.broadcast %cst_77 : f32 to vector<2x32xf32>
    %224 = arith.mulf %223, %222 : vector<2x32xf32>
    %225 = math.tanh %224 : vector<2x32xf32>
    %cst_78 = arith.constant 5.000000e-01 : f32
    %226 = vector.broadcast %cst_78 : f32 to vector<2x32xf32>
    %227 = arith.mulf %226, %225 : vector<2x32xf32>
    %cst_79 = arith.constant 5.000000e-01 : f32
    %228 = vector.broadcast %cst_79 : f32 to vector<2x32xf32>
    %229 = arith.addf %227, %228 : vector<2x32xf32>
    %230 = vector.extract_strided_slice %221 {offsets = [0, 32], sizes = [2, 32], strides = [1, 1]} : vector<2x128xf32> to vector<2x32xf32>
    %cst_80 = arith.constant 5.000000e-01 : f32
    %231 = vector.broadcast %cst_80 : f32 to vector<2x32xf32>
    %232 = arith.mulf %231, %230 : vector<2x32xf32>
    %233 = math.tanh %232 : vector<2x32xf32>
    %cst_81 = arith.constant 5.000000e-01 : f32
    %234 = vector.broadcast %cst_81 : f32 to vector<2x32xf32>
    %235 = arith.mulf %234, %233 : vector<2x32xf32>
    %cst_82 = arith.constant 5.000000e-01 : f32
    %236 = vector.broadcast %cst_82 : f32 to vector<2x32xf32>
    %237 = arith.addf %235, %236 : vector<2x32xf32>
    %238 = vector.extract_strided_slice %221 {offsets = [0, 64], sizes = [2, 32], strides = [1, 1]} : vector<2x128xf32> to vector<2x32xf32>
    %239 = math.tanh %238 : vector<2x32xf32>
    %240 = vector.extract_strided_slice %221 {offsets = [0, 96], sizes = [2, 32], strides = [1, 1]} : vector<2x128xf32> to vector<2x32xf32>
    %cst_83 = arith.constant 5.000000e-01 : f32
    %241 = vector.broadcast %cst_83 : f32 to vector<2x32xf32>
    %242 = arith.mulf %241, %240 : vector<2x32xf32>
    %243 = math.tanh %242 : vector<2x32xf32>
    %cst_84 = arith.constant 5.000000e-01 : f32
    %244 = vector.broadcast %cst_84 : f32 to vector<2x32xf32>
    %245 = arith.mulf %244, %243 : vector<2x32xf32>
    %cst_85 = arith.constant 5.000000e-01 : f32
    %246 = vector.broadcast %cst_85 : f32 to vector<2x32xf32>
    %247 = arith.addf %245, %246 : vector<2x32xf32>
    %248 = arith.mulf %237, %215 : vector<2x32xf32>
    %249 = arith.mulf %229, %239 : vector<2x32xf32>
    %250 = arith.addf %248, %249 : vector<2x32xf32>
    %251 = math.tanh %250 : vector<2x32xf32>
    %252 = arith.mulf %247, %251 : vector<2x32xf32>
    %c12 = arith.constant 12 : index
    %c0_86 = arith.constant 0 : index
    %253 = vector.load %arg11[%c12, %c0_86] : memref<16x32xf32, #tpu.memory_space<vmem>>, vector<2x32xf32>
    tpu.vector_store %arg11[%c12, %c0_86], %252 {strides = array<i32>} : memref<16x32xf32, #tpu.memory_space<vmem>>, vector<2x32xf32>,
    %254 = vector.extract_strided_slice %5 {offsets = [14, 0], sizes = [2, 128], strides = [1, 1]} : vector<16x128xf32> to vector<2x128xf32>
    %cst_87 = arith.constant dense<0.000000e+00> : vector<2x128xf32>
    %255 = tpu.matmul %252, %6, %cst_87 {dimension_numbers = #tpu.dot_dimension_numbers<[1], [0], [0], [1], [0, 0, 1, 1], [], []>} : vector<2x32xf32>, vector<32x128xf32>, vector<2x128xf32> -> vector<2x128xf32>
    %256 = arith.addf %254, %255 : vector<2x128xf32>
    %257 = vector.extract_strided_slice %256 {offsets = [0, 0], sizes = [2, 32], strides = [1, 1]} : vector<2x128xf32> to vector<2x32xf32>
    %cst_88 = arith.constant 5.000000e-01 : f32
    %258 = vector.broadcast %cst_88 : f32 to vector<2x32xf32>
    %259 = arith.mulf %258, %257 : vector<2x32xf32>
    %260 = math.tanh %259 : vector<2x32xf32>
    %cst_89 = arith.constant 5.000000e-01 : f32
    %261 = vector.broadcast %cst_89 : f32 to vector<2x32xf32>
    %262 = arith.mulf %261, %260 : vector<2x32xf32>
    %cst_90 = arith.constant 5.000000e-01 : f32
    %263 = vector.broadcast %cst_90 : f32 to vector<2x32xf32>
    %264 = arith.addf %262, %263 : vector<2x32xf32>
    %265 = vector.extract_strided_slice %256 {offsets = [0, 32], sizes = [2, 32], strides = [1, 1]} : vector<2x128xf32> to vector<2x32xf32>
    %cst_91 = arith.constant 5.000000e-01 : f32
    %266 = vector.broadcast %cst_91 : f32 to vector<2x32xf32>
    %267 = arith.mulf %266, %265 : vector<2x32xf32>
    %268 = math.tanh %267 : vector<2x32xf32>
    %cst_92 = arith.constant 5.000000e-01 : f32
    %269 = vector.broadcast %cst_92 : f32 to vector<2x32xf32>
    %270 = arith.mulf %269, %268 : vector<2x32xf32>
    %cst_93 = arith.constant 5.000000e-01 : f32
    %271 = vector.broadcast %cst_93 : f32 to vector<2x32xf32>
    %272 = arith.addf %270, %271 : vector<2x32xf32>
    %273 = vector.extract_strided_slice %256 {offsets = [0, 64], sizes = [2, 32], strides = [1, 1]} : vector<2x128xf32> to vector<2x32xf32>
    %274 = math.tanh %273 : vector<2x32xf32>
    %275 = vector.extract_strided_slice %256 {offsets = [0, 96], sizes = [2, 32], strides = [1, 1]} : vector<2x128xf32> to vector<2x32xf32>
    %cst_94 = arith.constant 5.000000e-01 : f32
    %276 = vector.broadcast %cst_94 : f32 to vector<2x32xf32>
    %277 = arith.mulf %276, %275 : vector<2x32xf32>
    %278 = math.tanh %277 : vector<2x32xf32>
    %cst_95 = arith.constant 5.000000e-01 : f32
    %279 = vector.broadcast %cst_95 : f32 to vector<2x32xf32>
    %280 = arith.mulf %279, %278 : vector<2x32xf32>
    %cst_96 = arith.constant 5.000000e-01 : f32
    %281 = vector.broadcast %cst_96 : f32 to vector<2x32xf32>
    %282 = arith.addf %280, %281 : vector<2x32xf32>
    %283 = arith.mulf %272, %250 : vector<2x32xf32>
    %284 = arith.mulf %264, %274 : vector<2x32xf32>
    %285 = arith.addf %283, %284 : vector<2x32xf32>
    %286 = math.tanh %285 : vector<2x32xf32>
    %287 = arith.mulf %282, %286 : vector<2x32xf32>
    %c14 = arith.constant 14 : index
    %c0_97 = arith.constant 0 : index
    %288 = vector.load %arg11[%c14, %c0_97] : memref<16x32xf32, #tpu.memory_space<vmem>>, vector<2x32xf32>
    tpu.vector_store %arg11[%c14, %c0_97], %287 {strides = array<i32>} : memref<16x32xf32, #tpu.memory_space<vmem>>, vector<2x32xf32>,
    %c0_98 = arith.constant 0 : index
    %c0_99 = arith.constant 0 : index
    %289 = vector.load %arg11[%c0_98, %c0_99] : memref<16x32xf32, #tpu.memory_space<vmem>>, vector<16x32xf32>
    %c0_100 = arith.constant 0 : index
    %c0_101 = arith.constant 0 : index
    %290 = vector.load %arg5[%c0_100, %c0_101] : memref<32x128xf32, #tpu.memory_space<vmem>>, vector<32x128xf32>
    %cst_102 = arith.constant dense<0.000000e+00> : vector<16x128xf32>
    %291 = tpu.matmul %289, %290, %cst_102 {dimension_numbers = #tpu.dot_dimension_numbers<[1], [0], [0], [1], [0, 0, 1, 1], [], []>} : vector<16x32xf32>, vector<32x128xf32>, vector<16x128xf32> -> vector<16x128xf32>
    %c0_103 = arith.constant 0 : index
    %c0_104 = arith.constant 0 : index
    %292 = vector.load %arg7[%c0_103, %c0_104] : memref<1x128xf32, #tpu.memory_space<vmem>>, vector<1x128xf32>
    %293 = vector.broadcast %292 : vector<1x128xf32> to vector<16x128xf32>
    %294 = arith.addf %291, %293 : vector<16x128xf32>
    %c0_105 = arith.constant 0 : index
    %c0_106 = arith.constant 0 : index
    %295 = vector.load %arg6[%c0_105, %c0_106] : memref<32x128xf32, #tpu.memory_space<vmem>>, vector<32x128xf32>
    %cst_107 = arith.constant 0.000000e+00 : f32
    %296 = vector.broadcast %cst_107 : f32 to vector<2x32xf32>
    %cst_108 = arith.constant 0.000000e+00 : f32
    %297 = vector.broadcast %cst_108 : f32 to vector<2x32xf32>
    %298 = vector.extract_strided_slice %294 {offsets = [0, 0], sizes = [2, 128], strides = [1, 1]} : vector<16x128xf32> to vector<2x128xf32>
    %cst_109 = arith.constant dense<0.000000e+00> : vector<2x128xf32>
    %299 = tpu.matmul %296, %295, %cst_109 {dimension_numbers = #tpu.dot_dimension_numbers<[1], [0], [0], [1], [0, 0, 1, 1], [], []>} : vector<2x32xf32>, vector<32x128xf32>, vector<2x128xf32> -> vector<2x128xf32>
    %300 = arith.addf %298, %299 : vector<2x128xf32>
    %301 = vector.extract_strided_slice %300 {offsets = [0, 0], sizes = [2, 32], strides = [1, 1]} : vector<2x128xf32> to vector<2x32xf32>
    %cst_110 = arith.constant 5.000000e-01 : f32
    %302 = vector.broadcast %cst_110 : f32 to vector<2x32xf32>
    %303 = arith.mulf %302, %301 : vector<2x32xf32>
    %304 = math.tanh %303 : vector<2x32xf32>
    %cst_111 = arith.constant 5.000000e-01 : f32
    %305 = vector.broadcast %cst_111 : f32 to vector<2x32xf32>
    %306 = arith.mulf %305, %304 : vector<2x32xf32>
    %cst_112 = arith.constant 5.000000e-01 : f32
    %307 = vector.broadcast %cst_112 : f32 to vector<2x32xf32>
    %308 = arith.addf %306, %307 : vector<2x32xf32>
    %309 = vector.extract_strided_slice %300 {offsets = [0, 32], sizes = [2, 32], strides = [1, 1]} : vector<2x128xf32> to vector<2x32xf32>
    %cst_113 = arith.constant 5.000000e-01 : f32
    %310 = vector.broadcast %cst_113 : f32 to vector<2x32xf32>
    %311 = arith.mulf %310, %309 : vector<2x32xf32>
    %312 = math.tanh %311 : vector<2x32xf32>
    %cst_114 = arith.constant 5.000000e-01 : f32
    %313 = vector.broadcast %cst_114 : f32 to vector<2x32xf32>
    %314 = arith.mulf %313, %312 : vector<2x32xf32>
    %cst_115 = arith.constant 5.000000e-01 : f32
    %315 = vector.broadcast %cst_115 : f32 to vector<2x32xf32>
    %316 = arith.addf %314, %315 : vector<2x32xf32>
    %317 = vector.extract_strided_slice %300 {offsets = [0, 64], sizes = [2, 32], strides = [1, 1]} : vector<2x128xf32> to vector<2x32xf32>
    %318 = math.tanh %317 : vector<2x32xf32>
    %319 = vector.extract_strided_slice %300 {offsets = [0, 96], sizes = [2, 32], strides = [1, 1]} : vector<2x128xf32> to vector<2x32xf32>
    %cst_116 = arith.constant 5.000000e-01 : f32
    %320 = vector.broadcast %cst_116 : f32 to vector<2x32xf32>
    %321 = arith.mulf %320, %319 : vector<2x32xf32>
    %322 = math.tanh %321 : vector<2x32xf32>
    %cst_117 = arith.constant 5.000000e-01 : f32
    %323 = vector.broadcast %cst_117 : f32 to vector<2x32xf32>
    %324 = arith.mulf %323, %322 : vector<2x32xf32>
    %cst_118 = arith.constant 5.000000e-01 : f32
    %325 = vector.broadcast %cst_118 : f32 to vector<2x32xf32>
    %326 = arith.addf %324, %325 : vector<2x32xf32>
    %327 = arith.mulf %316, %297 : vector<2x32xf32>
    %328 = arith.mulf %308, %318 : vector<2x32xf32>
    %329 = arith.addf %327, %328 : vector<2x32xf32>
    %330 = math.tanh %329 : vector<2x32xf32>
    %331 = arith.mulf %326, %330 : vector<2x32xf32>
    %332 = vector.extract_strided_slice %294 {offsets = [2, 0], sizes = [2, 128], strides = [1, 1]} : vector<16x128xf32> to vector<2x128xf32>
    %cst_119 = arith.constant dense<0.000000e+00> : vector<2x128xf32>
    %333 = tpu.matmul %331, %295, %cst_119 {dimension_numbers = #tpu.dot_dimension_numbers<[1], [0], [0], [1], [0, 0, 1, 1], [], []>} : vector<2x32xf32>, vector<32x128xf32>, vector<2x128xf32> -> vector<2x128xf32>
    %334 = arith.addf %332, %333 : vector<2x128xf32>
    %335 = vector.extract_strided_slice %334 {offsets = [0, 0], sizes = [2, 32], strides = [1, 1]} : vector<2x128xf32> to vector<2x32xf32>
    %cst_120 = arith.constant 5.000000e-01 : f32
    %336 = vector.broadcast %cst_120 : f32 to vector<2x32xf32>
    %337 = arith.mulf %336, %335 : vector<2x32xf32>
    %338 = math.tanh %337 : vector<2x32xf32>
    %cst_121 = arith.constant 5.000000e-01 : f32
    %339 = vector.broadcast %cst_121 : f32 to vector<2x32xf32>
    %340 = arith.mulf %339, %338 : vector<2x32xf32>
    %cst_122 = arith.constant 5.000000e-01 : f32
    %341 = vector.broadcast %cst_122 : f32 to vector<2x32xf32>
    %342 = arith.addf %340, %341 : vector<2x32xf32>
    %343 = vector.extract_strided_slice %334 {offsets = [0, 32], sizes = [2, 32], strides = [1, 1]} : vector<2x128xf32> to vector<2x32xf32>
    %cst_123 = arith.constant 5.000000e-01 : f32
    %344 = vector.broadcast %cst_123 : f32 to vector<2x32xf32>
    %345 = arith.mulf %344, %343 : vector<2x32xf32>
    %346 = math.tanh %345 : vector<2x32xf32>
    %cst_124 = arith.constant 5.000000e-01 : f32
    %347 = vector.broadcast %cst_124 : f32 to vector<2x32xf32>
    %348 = arith.mulf %347, %346 : vector<2x32xf32>
    %cst_125 = arith.constant 5.000000e-01 : f32
    %349 = vector.broadcast %cst_125 : f32 to vector<2x32xf32>
    %350 = arith.addf %348, %349 : vector<2x32xf32>
    %351 = vector.extract_strided_slice %334 {offsets = [0, 64], sizes = [2, 32], strides = [1, 1]} : vector<2x128xf32> to vector<2x32xf32>
    %352 = math.tanh %351 : vector<2x32xf32>
    %353 = vector.extract_strided_slice %334 {offsets = [0, 96], sizes = [2, 32], strides = [1, 1]} : vector<2x128xf32> to vector<2x32xf32>
    %cst_126 = arith.constant 5.000000e-01 : f32
    %354 = vector.broadcast %cst_126 : f32 to vector<2x32xf32>
    %355 = arith.mulf %354, %353 : vector<2x32xf32>
    %356 = math.tanh %355 : vector<2x32xf32>
    %cst_127 = arith.constant 5.000000e-01 : f32
    %357 = vector.broadcast %cst_127 : f32 to vector<2x32xf32>
    %358 = arith.mulf %357, %356 : vector<2x32xf32>
    %cst_128 = arith.constant 5.000000e-01 : f32
    %359 = vector.broadcast %cst_128 : f32 to vector<2x32xf32>
    %360 = arith.addf %358, %359 : vector<2x32xf32>
    %361 = arith.mulf %350, %329 : vector<2x32xf32>
    %362 = arith.mulf %342, %352 : vector<2x32xf32>
    %363 = arith.addf %361, %362 : vector<2x32xf32>
    %364 = math.tanh %363 : vector<2x32xf32>
    %365 = arith.mulf %360, %364 : vector<2x32xf32>
    %366 = vector.extract_strided_slice %294 {offsets = [4, 0], sizes = [2, 128], strides = [1, 1]} : vector<16x128xf32> to vector<2x128xf32>
    %cst_129 = arith.constant dense<0.000000e+00> : vector<2x128xf32>
    %367 = tpu.matmul %365, %295, %cst_129 {dimension_numbers = #tpu.dot_dimension_numbers<[1], [0], [0], [1], [0, 0, 1, 1], [], []>} : vector<2x32xf32>, vector<32x128xf32>, vector<2x128xf32> -> vector<2x128xf32>
    %368 = arith.addf %366, %367 : vector<2x128xf32>
    %369 = vector.extract_strided_slice %368 {offsets = [0, 0], sizes = [2, 32], strides = [1, 1]} : vector<2x128xf32> to vector<2x32xf32>
    %cst_130 = arith.constant 5.000000e-01 : f32
    %370 = vector.broadcast %cst_130 : f32 to vector<2x32xf32>
    %371 = arith.mulf %370, %369 : vector<2x32xf32>
    %372 = math.tanh %371 : vector<2x32xf32>
    %cst_131 = arith.constant 5.000000e-01 : f32
    %373 = vector.broadcast %cst_131 : f32 to vector<2x32xf32>
    %374 = arith.mulf %373, %372 : vector<2x32xf32>
    %cst_132 = arith.constant 5.000000e-01 : f32
    %375 = vector.broadcast %cst_132 : f32 to vector<2x32xf32>
    %376 = arith.addf %374, %375 : vector<2x32xf32>
    %377 = vector.extract_strided_slice %368 {offsets = [0, 32], sizes = [2, 32], strides = [1, 1]} : vector<2x128xf32> to vector<2x32xf32>
    %cst_133 = arith.constant 5.000000e-01 : f32
    %378 = vector.broadcast %cst_133 : f32 to vector<2x32xf32>
    %379 = arith.mulf %378, %377 : vector<2x32xf32>
    %380 = math.tanh %379 : vector<2x32xf32>
    %cst_134 = arith.constant 5.000000e-01 : f32
    %381 = vector.broadcast %cst_134 : f32 to vector<2x32xf32>
    %382 = arith.mulf %381, %380 : vector<2x32xf32>
    %cst_135 = arith.constant 5.000000e-01 : f32
    %383 = vector.broadcast %cst_135 : f32 to vector<2x32xf32>
    %384 = arith.addf %382, %383 : vector<2x32xf32>
    %385 = vector.extract_strided_slice %368 {offsets = [0, 64], sizes = [2, 32], strides = [1, 1]} : vector<2x128xf32> to vector<2x32xf32>
    %386 = math.tanh %385 : vector<2x32xf32>
    %387 = vector.extract_strided_slice %368 {offsets = [0, 96], sizes = [2, 32], strides = [1, 1]} : vector<2x128xf32> to vector<2x32xf32>
    %cst_136 = arith.constant 5.000000e-01 : f32
    %388 = vector.broadcast %cst_136 : f32 to vector<2x32xf32>
    %389 = arith.mulf %388, %387 : vector<2x32xf32>
    %390 = math.tanh %389 : vector<2x32xf32>
    %cst_137 = arith.constant 5.000000e-01 : f32
    %391 = vector.broadcast %cst_137 : f32 to vector<2x32xf32>
    %392 = arith.mulf %391, %390 : vector<2x32xf32>
    %cst_138 = arith.constant 5.000000e-01 : f32
    %393 = vector.broadcast %cst_138 : f32 to vector<2x32xf32>
    %394 = arith.addf %392, %393 : vector<2x32xf32>
    %395 = arith.mulf %384, %363 : vector<2x32xf32>
    %396 = arith.mulf %376, %386 : vector<2x32xf32>
    %397 = arith.addf %395, %396 : vector<2x32xf32>
    %398 = math.tanh %397 : vector<2x32xf32>
    %399 = arith.mulf %394, %398 : vector<2x32xf32>
    %400 = vector.extract_strided_slice %294 {offsets = [6, 0], sizes = [2, 128], strides = [1, 1]} : vector<16x128xf32> to vector<2x128xf32>
    %cst_139 = arith.constant dense<0.000000e+00> : vector<2x128xf32>
    %401 = tpu.matmul %399, %295, %cst_139 {dimension_numbers = #tpu.dot_dimension_numbers<[1], [0], [0], [1], [0, 0, 1, 1], [], []>} : vector<2x32xf32>, vector<32x128xf32>, vector<2x128xf32> -> vector<2x128xf32>
    %402 = arith.addf %400, %401 : vector<2x128xf32>
    %403 = vector.extract_strided_slice %402 {offsets = [0, 0], sizes = [2, 32], strides = [1, 1]} : vector<2x128xf32> to vector<2x32xf32>
    %cst_140 = arith.constant 5.000000e-01 : f32
    %404 = vector.broadcast %cst_140 : f32 to vector<2x32xf32>
    %405 = arith.mulf %404, %403 : vector<2x32xf32>
    %406 = math.tanh %405 : vector<2x32xf32>
    %cst_141 = arith.constant 5.000000e-01 : f32
    %407 = vector.broadcast %cst_141 : f32 to vector<2x32xf32>
    %408 = arith.mulf %407, %406 : vector<2x32xf32>
    %cst_142 = arith.constant 5.000000e-01 : f32
    %409 = vector.broadcast %cst_142 : f32 to vector<2x32xf32>
    %410 = arith.addf %408, %409 : vector<2x32xf32>
    %411 = vector.extract_strided_slice %402 {offsets = [0, 32], sizes = [2, 32], strides = [1, 1]} : vector<2x128xf32> to vector<2x32xf32>
    %cst_143 = arith.constant 5.000000e-01 : f32
    %412 = vector.broadcast %cst_143 : f32 to vector<2x32xf32>
    %413 = arith.mulf %412, %411 : vector<2x32xf32>
    %414 = math.tanh %413 : vector<2x32xf32>
    %cst_144 = arith.constant 5.000000e-01 : f32
    %415 = vector.broadcast %cst_144 : f32 to vector<2x32xf32>
    %416 = arith.mulf %415, %414 : vector<2x32xf32>
    %cst_145 = arith.constant 5.000000e-01 : f32
    %417 = vector.broadcast %cst_145 : f32 to vector<2x32xf32>
    %418 = arith.addf %416, %417 : vector<2x32xf32>
    %419 = vector.extract_strided_slice %402 {offsets = [0, 64], sizes = [2, 32], strides = [1, 1]} : vector<2x128xf32> to vector<2x32xf32>
    %420 = math.tanh %419 : vector<2x32xf32>
    %421 = vector.extract_strided_slice %402 {offsets = [0, 96], sizes = [2, 32], strides = [1, 1]} : vector<2x128xf32> to vector<2x32xf32>
    %cst_146 = arith.constant 5.000000e-01 : f32
    %422 = vector.broadcast %cst_146 : f32 to vector<2x32xf32>
    %423 = arith.mulf %422, %421 : vector<2x32xf32>
    %424 = math.tanh %423 : vector<2x32xf32>
    %cst_147 = arith.constant 5.000000e-01 : f32
    %425 = vector.broadcast %cst_147 : f32 to vector<2x32xf32>
    %426 = arith.mulf %425, %424 : vector<2x32xf32>
    %cst_148 = arith.constant 5.000000e-01 : f32
    %427 = vector.broadcast %cst_148 : f32 to vector<2x32xf32>
    %428 = arith.addf %426, %427 : vector<2x32xf32>
    %429 = arith.mulf %418, %397 : vector<2x32xf32>
    %430 = arith.mulf %410, %420 : vector<2x32xf32>
    %431 = arith.addf %429, %430 : vector<2x32xf32>
    %432 = math.tanh %431 : vector<2x32xf32>
    %433 = arith.mulf %428, %432 : vector<2x32xf32>
    %434 = vector.extract_strided_slice %294 {offsets = [8, 0], sizes = [2, 128], strides = [1, 1]} : vector<16x128xf32> to vector<2x128xf32>
    %cst_149 = arith.constant dense<0.000000e+00> : vector<2x128xf32>
    %435 = tpu.matmul %433, %295, %cst_149 {dimension_numbers = #tpu.dot_dimension_numbers<[1], [0], [0], [1], [0, 0, 1, 1], [], []>} : vector<2x32xf32>, vector<32x128xf32>, vector<2x128xf32> -> vector<2x128xf32>
    %436 = arith.addf %434, %435 : vector<2x128xf32>
    %437 = vector.extract_strided_slice %436 {offsets = [0, 0], sizes = [2, 32], strides = [1, 1]} : vector<2x128xf32> to vector<2x32xf32>
    %cst_150 = arith.constant 5.000000e-01 : f32
    %438 = vector.broadcast %cst_150 : f32 to vector<2x32xf32>
    %439 = arith.mulf %438, %437 : vector<2x32xf32>
    %440 = math.tanh %439 : vector<2x32xf32>
    %cst_151 = arith.constant 5.000000e-01 : f32
    %441 = vector.broadcast %cst_151 : f32 to vector<2x32xf32>
    %442 = arith.mulf %441, %440 : vector<2x32xf32>
    %cst_152 = arith.constant 5.000000e-01 : f32
    %443 = vector.broadcast %cst_152 : f32 to vector<2x32xf32>
    %444 = arith.addf %442, %443 : vector<2x32xf32>
    %445 = vector.extract_strided_slice %436 {offsets = [0, 32], sizes = [2, 32], strides = [1, 1]} : vector<2x128xf32> to vector<2x32xf32>
    %cst_153 = arith.constant 5.000000e-01 : f32
    %446 = vector.broadcast %cst_153 : f32 to vector<2x32xf32>
    %447 = arith.mulf %446, %445 : vector<2x32xf32>
    %448 = math.tanh %447 : vector<2x32xf32>
    %cst_154 = arith.constant 5.000000e-01 : f32
    %449 = vector.broadcast %cst_154 : f32 to vector<2x32xf32>
    %450 = arith.mulf %449, %448 : vector<2x32xf32>
    %cst_155 = arith.constant 5.000000e-01 : f32
    %451 = vector.broadcast %cst_155 : f32 to vector<2x32xf32>
    %452 = arith.addf %450, %451 : vector<2x32xf32>
    %453 = vector.extract_strided_slice %436 {offsets = [0, 64], sizes = [2, 32], strides = [1, 1]} : vector<2x128xf32> to vector<2x32xf32>
    %454 = math.tanh %453 : vector<2x32xf32>
    %455 = vector.extract_strided_slice %436 {offsets = [0, 96], sizes = [2, 32], strides = [1, 1]} : vector<2x128xf32> to vector<2x32xf32>
    %cst_156 = arith.constant 5.000000e-01 : f32
    %456 = vector.broadcast %cst_156 : f32 to vector<2x32xf32>
    %457 = arith.mulf %456, %455 : vector<2x32xf32>
    %458 = math.tanh %457 : vector<2x32xf32>
    %cst_157 = arith.constant 5.000000e-01 : f32
    %459 = vector.broadcast %cst_157 : f32 to vector<2x32xf32>
    %460 = arith.mulf %459, %458 : vector<2x32xf32>
    %cst_158 = arith.constant 5.000000e-01 : f32
    %461 = vector.broadcast %cst_158 : f32 to vector<2x32xf32>
    %462 = arith.addf %460, %461 : vector<2x32xf32>
    %463 = arith.mulf %452, %431 : vector<2x32xf32>
    %464 = arith.mulf %444, %454 : vector<2x32xf32>
    %465 = arith.addf %463, %464 : vector<2x32xf32>
    %466 = math.tanh %465 : vector<2x32xf32>
    %467 = arith.mulf %462, %466 : vector<2x32xf32>
    %468 = vector.extract_strided_slice %294 {offsets = [10, 0], sizes = [2, 128], strides = [1, 1]} : vector<16x128xf32> to vector<2x128xf32>
    %cst_159 = arith.constant dense<0.000000e+00> : vector<2x128xf32>
    %469 = tpu.matmul %467, %295, %cst_159 {dimension_numbers = #tpu.dot_dimension_numbers<[1], [0], [0], [1], [0, 0, 1, 1], [], []>} : vector<2x32xf32>, vector<32x128xf32>, vector<2x128xf32> -> vector<2x128xf32>
    %470 = arith.addf %468, %469 : vector<2x128xf32>
    %471 = vector.extract_strided_slice %470 {offsets = [0, 0], sizes = [2, 32], strides = [1, 1]} : vector<2x128xf32> to vector<2x32xf32>
    %cst_160 = arith.constant 5.000000e-01 : f32
    %472 = vector.broadcast %cst_160 : f32 to vector<2x32xf32>
    %473 = arith.mulf %472, %471 : vector<2x32xf32>
    %474 = math.tanh %473 : vector<2x32xf32>
    %cst_161 = arith.constant 5.000000e-01 : f32
    %475 = vector.broadcast %cst_161 : f32 to vector<2x32xf32>
    %476 = arith.mulf %475, %474 : vector<2x32xf32>
    %cst_162 = arith.constant 5.000000e-01 : f32
    %477 = vector.broadcast %cst_162 : f32 to vector<2x32xf32>
    %478 = arith.addf %476, %477 : vector<2x32xf32>
    %479 = vector.extract_strided_slice %470 {offsets = [0, 32], sizes = [2, 32], strides = [1, 1]} : vector<2x128xf32> to vector<2x32xf32>
    %cst_163 = arith.constant 5.000000e-01 : f32
    %480 = vector.broadcast %cst_163 : f32 to vector<2x32xf32>
    %481 = arith.mulf %480, %479 : vector<2x32xf32>
    %482 = math.tanh %481 : vector<2x32xf32>
    %cst_164 = arith.constant 5.000000e-01 : f32
    %483 = vector.broadcast %cst_164 : f32 to vector<2x32xf32>
    %484 = arith.mulf %483, %482 : vector<2x32xf32>
    %cst_165 = arith.constant 5.000000e-01 : f32
    %485 = vector.broadcast %cst_165 : f32 to vector<2x32xf32>
    %486 = arith.addf %484, %485 : vector<2x32xf32>
    %487 = vector.extract_strided_slice %470 {offsets = [0, 64], sizes = [2, 32], strides = [1, 1]} : vector<2x128xf32> to vector<2x32xf32>
    %488 = math.tanh %487 : vector<2x32xf32>
    %489 = vector.extract_strided_slice %470 {offsets = [0, 96], sizes = [2, 32], strides = [1, 1]} : vector<2x128xf32> to vector<2x32xf32>
    %cst_166 = arith.constant 5.000000e-01 : f32
    %490 = vector.broadcast %cst_166 : f32 to vector<2x32xf32>
    %491 = arith.mulf %490, %489 : vector<2x32xf32>
    %492 = math.tanh %491 : vector<2x32xf32>
    %cst_167 = arith.constant 5.000000e-01 : f32
    %493 = vector.broadcast %cst_167 : f32 to vector<2x32xf32>
    %494 = arith.mulf %493, %492 : vector<2x32xf32>
    %cst_168 = arith.constant 5.000000e-01 : f32
    %495 = vector.broadcast %cst_168 : f32 to vector<2x32xf32>
    %496 = arith.addf %494, %495 : vector<2x32xf32>
    %497 = arith.mulf %486, %465 : vector<2x32xf32>
    %498 = arith.mulf %478, %488 : vector<2x32xf32>
    %499 = arith.addf %497, %498 : vector<2x32xf32>
    %500 = math.tanh %499 : vector<2x32xf32>
    %501 = arith.mulf %496, %500 : vector<2x32xf32>
    %502 = vector.extract_strided_slice %294 {offsets = [12, 0], sizes = [2, 128], strides = [1, 1]} : vector<16x128xf32> to vector<2x128xf32>
    %cst_169 = arith.constant dense<0.000000e+00> : vector<2x128xf32>
    %503 = tpu.matmul %501, %295, %cst_169 {dimension_numbers = #tpu.dot_dimension_numbers<[1], [0], [0], [1], [0, 0, 1, 1], [], []>} : vector<2x32xf32>, vector<32x128xf32>, vector<2x128xf32> -> vector<2x128xf32>
    %504 = arith.addf %502, %503 : vector<2x128xf32>
    %505 = vector.extract_strided_slice %504 {offsets = [0, 0], sizes = [2, 32], strides = [1, 1]} : vector<2x128xf32> to vector<2x32xf32>
    %cst_170 = arith.constant 5.000000e-01 : f32
    %506 = vector.broadcast %cst_170 : f32 to vector<2x32xf32>
    %507 = arith.mulf %506, %505 : vector<2x32xf32>
    %508 = math.tanh %507 : vector<2x32xf32>
    %cst_171 = arith.constant 5.000000e-01 : f32
    %509 = vector.broadcast %cst_171 : f32 to vector<2x32xf32>
    %510 = arith.mulf %509, %508 : vector<2x32xf32>
    %cst_172 = arith.constant 5.000000e-01 : f32
    %511 = vector.broadcast %cst_172 : f32 to vector<2x32xf32>
    %512 = arith.addf %510, %511 : vector<2x32xf32>
    %513 = vector.extract_strided_slice %504 {offsets = [0, 32], sizes = [2, 32], strides = [1, 1]} : vector<2x128xf32> to vector<2x32xf32>
    %cst_173 = arith.constant 5.000000e-01 : f32
    %514 = vector.broadcast %cst_173 : f32 to vector<2x32xf32>
    %515 = arith.mulf %514, %513 : vector<2x32xf32>
    %516 = math.tanh %515 : vector<2x32xf32>
    %cst_174 = arith.constant 5.000000e-01 : f32
    %517 = vector.broadcast %cst_174 : f32 to vector<2x32xf32>
    %518 = arith.mulf %517, %516 : vector<2x32xf32>
    %cst_175 = arith.constant 5.000000e-01 : f32
    %519 = vector.broadcast %cst_175 : f32 to vector<2x32xf32>
    %520 = arith.addf %518, %519 : vector<2x32xf32>
    %521 = vector.extract_strided_slice %504 {offsets = [0, 64], sizes = [2, 32], strides = [1, 1]} : vector<2x128xf32> to vector<2x32xf32>
    %522 = math.tanh %521 : vector<2x32xf32>
    %523 = vector.extract_strided_slice %504 {offsets = [0, 96], sizes = [2, 32], strides = [1, 1]} : vector<2x128xf32> to vector<2x32xf32>
    %cst_176 = arith.constant 5.000000e-01 : f32
    %524 = vector.broadcast %cst_176 : f32 to vector<2x32xf32>
    %525 = arith.mulf %524, %523 : vector<2x32xf32>
    %526 = math.tanh %525 : vector<2x32xf32>
    %cst_177 = arith.constant 5.000000e-01 : f32
    %527 = vector.broadcast %cst_177 : f32 to vector<2x32xf32>
    %528 = arith.mulf %527, %526 : vector<2x32xf32>
    %cst_178 = arith.constant 5.000000e-01 : f32
    %529 = vector.broadcast %cst_178 : f32 to vector<2x32xf32>
    %530 = arith.addf %528, %529 : vector<2x32xf32>
    %531 = arith.mulf %520, %499 : vector<2x32xf32>
    %532 = arith.mulf %512, %522 : vector<2x32xf32>
    %533 = arith.addf %531, %532 : vector<2x32xf32>
    %534 = math.tanh %533 : vector<2x32xf32>
    %535 = arith.mulf %530, %534 : vector<2x32xf32>
    %536 = vector.extract_strided_slice %294 {offsets = [14, 0], sizes = [2, 128], strides = [1, 1]} : vector<16x128xf32> to vector<2x128xf32>
    %cst_179 = arith.constant dense<0.000000e+00> : vector<2x128xf32>
    %537 = tpu.matmul %535, %295, %cst_179 {dimension_numbers = #tpu.dot_dimension_numbers<[1], [0], [0], [1], [0, 0, 1, 1], [], []>} : vector<2x32xf32>, vector<32x128xf32>, vector<2x128xf32> -> vector<2x128xf32>
    %538 = arith.addf %536, %537 : vector<2x128xf32>
    %539 = vector.extract_strided_slice %538 {offsets = [0, 0], sizes = [2, 32], strides = [1, 1]} : vector<2x128xf32> to vector<2x32xf32>
    %cst_180 = arith.constant 5.000000e-01 : f32
    %540 = vector.broadcast %cst_180 : f32 to vector<2x32xf32>
    %541 = arith.mulf %540, %539 : vector<2x32xf32>
    %542 = math.tanh %541 : vector<2x32xf32>
    %cst_181 = arith.constant 5.000000e-01 : f32
    %543 = vector.broadcast %cst_181 : f32 to vector<2x32xf32>
    %544 = arith.mulf %543, %542 : vector<2x32xf32>
    %cst_182 = arith.constant 5.000000e-01 : f32
    %545 = vector.broadcast %cst_182 : f32 to vector<2x32xf32>
    %546 = arith.addf %544, %545 : vector<2x32xf32>
    %547 = vector.extract_strided_slice %538 {offsets = [0, 32], sizes = [2, 32], strides = [1, 1]} : vector<2x128xf32> to vector<2x32xf32>
    %cst_183 = arith.constant 5.000000e-01 : f32
    %548 = vector.broadcast %cst_183 : f32 to vector<2x32xf32>
    %549 = arith.mulf %548, %547 : vector<2x32xf32>
    %550 = math.tanh %549 : vector<2x32xf32>
    %cst_184 = arith.constant 5.000000e-01 : f32
    %551 = vector.broadcast %cst_184 : f32 to vector<2x32xf32>
    %552 = arith.mulf %551, %550 : vector<2x32xf32>
    %cst_185 = arith.constant 5.000000e-01 : f32
    %553 = vector.broadcast %cst_185 : f32 to vector<2x32xf32>
    %554 = arith.addf %552, %553 : vector<2x32xf32>
    %555 = vector.extract_strided_slice %538 {offsets = [0, 64], sizes = [2, 32], strides = [1, 1]} : vector<2x128xf32> to vector<2x32xf32>
    %556 = math.tanh %555 : vector<2x32xf32>
    %557 = vector.extract_strided_slice %538 {offsets = [0, 96], sizes = [2, 32], strides = [1, 1]} : vector<2x128xf32> to vector<2x32xf32>
    %cst_186 = arith.constant 5.000000e-01 : f32
    %558 = vector.broadcast %cst_186 : f32 to vector<2x32xf32>
    %559 = arith.mulf %558, %557 : vector<2x32xf32>
    %560 = math.tanh %559 : vector<2x32xf32>
    %cst_187 = arith.constant 5.000000e-01 : f32
    %561 = vector.broadcast %cst_187 : f32 to vector<2x32xf32>
    %562 = arith.mulf %561, %560 : vector<2x32xf32>
    %cst_188 = arith.constant 5.000000e-01 : f32
    %563 = vector.broadcast %cst_188 : f32 to vector<2x32xf32>
    %564 = arith.addf %562, %563 : vector<2x32xf32>
    %565 = arith.mulf %554, %533 : vector<2x32xf32>
    %566 = arith.mulf %546, %556 : vector<2x32xf32>
    %567 = arith.addf %565, %566 : vector<2x32xf32>
    %568 = math.tanh %567 : vector<2x32xf32>
    %569 = arith.mulf %564, %568 : vector<2x32xf32>
    %c0_189 = arith.constant 0 : index
    %c0_190 = arith.constant 0 : index
    %570 = vector.load %arg8[%c0_189, %c0_190] : memref<32x8xf32, #tpu.memory_space<vmem>>, vector<32x8xf32>
    %cst_191 = arith.constant dense<0.000000e+00> : vector<2x8xf32>
    %571 = tpu.matmul %569, %570, %cst_191 {dimension_numbers = #tpu.dot_dimension_numbers<[1], [0], [0], [1], [0, 0, 1, 1], [], []>} : vector<2x32xf32>, vector<32x8xf32>, vector<2x8xf32> -> vector<2x8xf32>
    %c0_192 = arith.constant 0 : index
    %c0_193 = arith.constant 0 : index
    %572 = vector.load %arg9[%c0_192, %c0_193] : memref<1x8xf32, #tpu.memory_space<vmem>>, vector<1x8xf32>
    %573 = vector.broadcast %572 : vector<1x8xf32> to vector<2x8xf32>
    %574 = arith.addf %571, %573 : vector<2x8xf32>
    %c0_194 = arith.constant 0 : index
    %c0_195 = arith.constant 0 : index
    %575 = vector.load %arg10[%c0_194, %c0_195] : memref<2x8xf32, #tpu.memory_space<vmem>>, vector<2x8xf32>
    tpu.vector_store %arg10[%c0_194, %c0_195], %574 {strides = array<i32>} : memref<2x8xf32, #tpu.memory_space<vmem>>, vector<2x8xf32>,
    return
  }
  func.func @transform_0(%arg0: i32) -> (i32, i32) {
    %c0_i32 = arith.constant 0 : i32
    %c0_i32_0 = arith.constant 0 : i32
    %c0_i32_1 = arith.constant 0 : i32
    return %c0_i32, %c0_i32_0 : i32, i32
  }
  func.func @transform_1(%arg0: i32) -> (i32, i32) {
    %c0_i32 = arith.constant 0 : i32
    %c0_i32_0 = arith.constant 0 : i32
    %c0_i32_1 = arith.constant 0 : i32
    return %c0_i32, %c0_i32_0 : i32, i32
  }
  func.func @transform_2(%arg0: i32) -> (i32, i32) {
    %c0_i32 = arith.constant 0 : i32
    %c0_i32_0 = arith.constant 0 : i32
    %c0_i32_1 = arith.constant 0 : i32
    return %c0_i32, %c0_i32_0 : i32, i32
  }
  func.func @transform_3(%arg0: i32) -> (i32, i32) {
    %c0_i32 = arith.constant 0 : i32
    %c0_i32_0 = arith.constant 0 : i32
    %c0_i32_1 = arith.constant 0 : i32
    return %c0_i32, %c0_i32_0 : i32, i32
  }
  func.func @transform_4(%arg0: i32) -> (i32, i32) {
    %c0_i32 = arith.constant 0 : i32
    %c0_i32_0 = arith.constant 0 : i32
    %c0_i32_1 = arith.constant 0 : i32
    return %c0_i32, %c0_i32_0 : i32, i32
  }
  func.func @transform_5(%arg0: i32) -> (i32, i32) {
    %c0_i32 = arith.constant 0 : i32
    %c0_i32_0 = arith.constant 0 : i32
    %c0_i32_1 = arith.constant 0 : i32
    return %c0_i32, %c0_i32_0 : i32, i32
  }
  func.func @transform_6(%arg0: i32) -> (i32, i32) {
    %c0_i32 = arith.constant 0 : i32
    %c0_i32_0 = arith.constant 0 : i32
    %c0_i32_1 = arith.constant 0 : i32
    return %c0_i32, %c0_i32_0 : i32, i32
  }
  func.func @transform_7(%arg0: i32) -> (i32, i32) {
    %c0_i32 = arith.constant 0 : i32
    %c0_i32_0 = arith.constant 0 : i32
    %c0_i32_1 = arith.constant 0 : i32
    return %c0_i32, %c0_i32_0 : i32, i32
  }
  func.func @transform_8(%arg0: i32) -> (i32, i32) {
    %c0_i32 = arith.constant 0 : i32
    %c0_i32_0 = arith.constant 0 : i32
    %c0_i32_1 = arith.constant 0 : i32
    return %c0_i32, %c0_i32_0 : i32, i32
  }
  func.func @transform_9(%arg0: i32) -> (i32, i32) {
    %c0_i32 = arith.constant 0 : i32
    %c0_i32_0 = arith.constant 0 : i32
    %c0_i32_1 = arith.constant 0 : i32
    return %c0_i32, %c0_i32_0 : i32, i32
  }
}

</mosaic_0001>

<llo_original>
// kernel: tpu_custom_call.1
$region0: #{tpu_custom_call.1}
  #allocation0 [shape = 'u32[]', space=smem, size = 0x4, offset = 0x4, fixed_abs, tag = 'smem constant byte address 0x4 - core index']
  #allocation1 [shape = 'u32[144,128]{1,0:T(1,128)}', space=vmem, size = 0x12000, scoped, tag = 'internal scratch']
  #allocation2 [shape = 'f32[16,32]{1,0:T(8,128)}', space=vmem, size = 0x2000, scoped, tag = 'scratch operand']
  %s0 = inlined_call_operand.hbm [shape: f32[16,16], index: 0, kind: input, shape index: {}]
  %s1 = inlined_call_operand.hbm [shape: f32[16,128], index: 1, kind: input, shape index: {}]
  %s2 = inlined_call_operand.vmem [shape: f32[32,128], index: 2, kind: input, shape index: {}]
  %s3 = inlined_call_operand.vmem [shape: f32[1,128], index: 3, kind: input, shape index: {}]
  %s4 = inlined_call_operand.hbm [shape: f32[32,128], index: 4, kind: input, shape index: {}]
  %s5 = inlined_call_operand.hbm [shape: f32[32,128], index: 5, kind: input, shape index: {}]
  %s6 = inlined_call_operand.vmem [shape: f32[1,128], index: 6, kind: input, shape index: {}]
  %s7 = inlined_call_operand.vmem [shape: f32[32,8], index: 7, kind: input, shape index: {}]
  %s8 = inlined_call_operand.vmem [shape: f32[1,8], index: 8, kind: input, shape index: {}]
  %s9 = inlined_call_operand.hbm [shape: f32[2,8], index: 9, kind: output, shape index: {}]
  %s10 = sld [smem:[#allocation0]]
  $region62: #{tpu_custom_call.1} parent=0
    _
  %s12 = ssub.s32 1, %s10
  %s13 = scalar_select 0, %s12, %s10
  $region1: #{tpu_custom_call.1} parent=0
    #allocation3 [shape = 'u8[8192]{0}', space=vmem, size = 0x2000, scoped, tag = 'input window, operand 0, single buffered']
    #allocation4 [shape = 's32[1]{0}', space=sflag, size = 0x4, scoped, tag = 'scoped memory for tpu_custom_call.1']
    #allocation5 [shape = 's32[1]{0}', space=sflag, size = 0x4, scoped, tag = 'scoped memory for tpu_custom_call.1']
    #allocation6 [shape = 'u8[8192]{0}', space=vmem, size = 0x2000, scoped, tag = 'input window, operand 1, single buffered']
    #allocation7 [shape = 's32[1]{0}', space=sflag, size = 0x4, scoped, tag = 'scoped memory for tpu_custom_call.1']
    #allocation8 [shape = 'u8[16384]{0}', space=vmem, size = 0x4000, scoped, tag = 'input window, operand 4, single buffered']
    #allocation9 [shape = 'u8[16384]{0}', space=vmem, size = 0x4000, scoped, tag = 'input window, operand 5, single buffered']
    #allocation10 [shape = 's32[1]{0}', space=sflag, size = 0x4, scoped, tag = 'scoped memory for tpu_custom_call.1']
    #allocation11 [shape = 'u8[1024]{0}', space=vmem, size = 0x400, scoped, tag = 'output window, operand 0, single buffered']
    %14 = vsyncpa [#allocation4], 0
    %15 = vsyncpa [#allocation7], 0
    %16 = vsyncpa [#allocation10], 0
    %17 = vsyncpa [#allocation5], 0
    // Predicated region
    $region2: #{tpu_custom_call.1} parent=1 // pred_check
      _
    $region3: #{tpu_custom_call.1} parent=1 // pred_check_branch
      %19 = sbr.rel (0) target = $region5
    $region4: #{tpu_custom_call.1} parent=1 // pred_region
      %s21 = ssub.s32 256, 256
      %22 = vsyncadd [#allocation4], %s21
      %s23 = sshll.u32 [#allocation3], 4
      %s24 = int_to_ptr.vmem [resolvable:$true] %s23
      %29 = dma.hbm_to_vmem [thread:$0]  %s0, 256, %s24, [#allocation4], 128, 128, 8
    $region5: #{tpu_custom_call.1} parent=1 // pred_fallthru
      _
    // Predicated region
    $region6: #{tpu_custom_call.1} parent=1 // pred_check
      _
    $region7: #{tpu_custom_call.1} parent=1 // pred_check_branch
      %31 = sbr.rel (0) target = $region9
    $region8: #{tpu_custom_call.1} parent=1 // pred_region
      %s33 = ssub.s32 256, 256
      %34 = vsyncadd [#allocation7], %s33
      %s35 = sshll.u32 [#allocation6], 4
      %s36 = int_to_ptr.vmem [resolvable:$true] %s35
      %41 = dma.hbm_to_vmem [thread:$0]  %s1, 256, %s36, [#allocation7], 128, 128, 8
    $region9: #{tpu_custom_call.1} parent=1 // pred_fallthru
      _
    // Predicated region
    $region10: #{tpu_custom_call.1} parent=1 // pred_check
      _
    $region11: #{tpu_custom_call.1} parent=1 // pred_check_branch
      %43 = sbr.rel (0) target = $region13
    $region12: #{tpu_custom_call.1} parent=1 // pred_region
      _
    $region13: #{tpu_custom_call.1} parent=1 // pred_fallthru
      _
    // Predicated region
    $region14: #{tpu_custom_call.1} parent=1 // pred_check
      _
    $region15: #{tpu_custom_call.1} parent=1 // pred_check_branch
      %45 = sbr.rel (0) target = $region17
    $region16: #{tpu_custom_call.1} parent=1 // pred_region
      _
    $region17: #{tpu_custom_call.1} parent=1 // pred_fallthru
      _
    // Predicated region
    $region18: #{tpu_custom_call.1} parent=1 // pred_check
      _
    $region19: #{tpu_custom_call.1} parent=1 // pred_check_branch
      %47 = sbr.rel (0) target = $region21
    $region20: #{tpu_custom_call.1} parent=1 // pred_region
      %s49 = ssub.s32 512, 512
      %50 = vsyncadd [#allocation7], %s49
      %s51 = sshll.u32 [#allocation8], 4
      %s52 = int_to_ptr.vmem [resolvable:$true] %s51
      %57 = dma.hbm_to_vmem [thread:$0]  %s4, 512, %s52, [#allocation7], 128, 128, 8
    $region21: #{tpu_custom_call.1} parent=1 // pred_fallthru
      _
    // Predicated region
    $region22: #{tpu_custom_call.1} parent=1 // pred_check
      _
    $region23: #{tpu_custom_call.1} parent=1 // pred_check_branch
      %59 = sbr.rel (0) target = $region25
    $region24: #{tpu_custom_call.1} parent=1 // pred_region
      %s61 = ssub.s32 512, 512
      %62 = vsyncadd [#allocation10], %s61
      %s63 = sshll.u32 [#allocation9], 4
      %s64 = int_to_ptr.vmem [resolvable:$true] %s63
      %69 = dma.hbm_to_vmem [thread:$0]  %s5, 512, %s64, [#allocation10], 128, 128, 8
    $region25: #{tpu_custom_call.1} parent=1 // pred_fallthru
      _
    // Predicated region
    $region26: #{tpu_custom_call.1} parent=1 // pred_check
      _
    $region27: #{tpu_custom_call.1} parent=1 // pred_check_branch
      %71 = sbr.rel (0) target = $region29
    $region28: #{tpu_custom_call.1} parent=1 // pred_region
      _
    $region29: #{tpu_custom_call.1} parent=1 // pred_fallthru
      _
    // Predicated region
    $region30: #{tpu_custom_call.1} parent=1 // pred_check
      _
    $region31: #{tpu_custom_call.1} parent=1 // pred_check_branch
      %73 = sbr.rel (0) target = $region33
    $region32: #{tpu_custom_call.1} parent=1 // pred_region
      _
    $region33: #{tpu_custom_call.1} parent=1 // pred_fallthru
      _
    // Predicated region
    $region34: #{tpu_custom_call.1} parent=1 // pred_check
      _
    $region35: #{tpu_custom_call.1} parent=1 // pred_check_branch
      %75 = sbr.rel (0) target = $region37
    $region36: #{tpu_custom_call.1} parent=1 // pred_region
      _
    $region37: #{tpu_custom_call.1} parent=1 // pred_fallthru
      _
    // Predicated region
    $region38: #{tpu_custom_call.1} parent=1 // pred_check
      _
    $region39: #{tpu_custom_call.1} parent=1 // pred_check_branch
      %77 = sbr.rel (0) target = $region41
    $region40: #{tpu_custom_call.1} parent=1 // pred_region
      %78 = dma.done [#allocation4], 256
    $region41: #{tpu_custom_call.1} parent=1 // pred_fallthru
      _
    // Predicated region
    $region42: #{tpu_custom_call.1} parent=1 // pred_check
      _
    $region43: #{tpu_custom_call.1} parent=1 // pred_check_branch
      %80 = sbr.rel (0) target = $region45
    $region44: #{tpu_custom_call.1} parent=1 // pred_region
      %81 = dma.done [#allocation7], 256
    $region45: #{tpu_custom_call.1} parent=1 // pred_fallthru
      _
    // Predicated region
    $region46: #{tpu_custom_call.1} parent=1 // pred_check
      _
    $region47: #{tpu_custom_call.1} parent=1 // pred_check_branch
      %83 = sbr.rel (0) target = $region49
    $region48: #{tpu_custom_call.1} parent=1 // pred_region
      %84 = dma.done [#allocation7], 512
    $region49: #{tpu_custom_call.1} parent=1 // pred_fallthru
      _
    // Predicated region
    $region50: #{tpu_custom_call.1} parent=1 // pred_check
      _
    $region51: #{tpu_custom_call.1} parent=1 // pred_check_branch
      %86 = sbr.rel (0) target = $region53
    $region52: #{tpu_custom_call.1} parent=1 // pred_region
      %87 = dma.done [#allocation10], 512
    $region53: #{tpu_custom_call.1} parent=1 // pred_fallthru
      _
    %v88 = vld [vmem:[#allocation3] sm:$0xff]
    %v89 = vld [vmem:[#allocation3 + $0x8] sm:$0xff]
    %v90 = vld [vmem:[#allocation6] sm:$0xff]
    %v91 = vld [vmem:[#allocation6 + $0x8] sm:$0xff]
    %v92 = vld [vmem:[%s3] sm:$0x1]
    %v94 = vlaneseq
    %v95 = vshrl.u32 %v94, 7
    %v96 = vsub.s32 0, %v95
    %v97 = vrot.slane %v92, %v96
    %vm99 = vcmask 130048
    %v101 = vsel %vm99, %v88, 0
    %v104 = vsel %vm99, %v89, 0
    %106 = vmatprep.subr.mxu0 0.0
    %107 = vmatpush1.msra.mxu0 %v90
    %108 = vmatprep.subr.mxu0 0.0
    %109 = vmatpush1.msra.mxu0 %v91
    %110 = vmatprep.subr.mxu0 0.0
    %111 = vmatpush1.msra.mxu0 0.0
    %112 = vmatprep.subr.mxu0 0.0
    %113 = vmatpush1.msra.mxu0 0.0
    %114 = vmatprep.subr.mxu0 0.0
    %115 = vmatpush1.msra.mxu0 0.0
    %116 = vmatprep.subr.mxu0 0.0
    %117 = vmatpush1.msra.mxu0 0.0
    %118 = vmatprep.subr.mxu0 0.0
    %119 = vmatpush1.msra.mxu0 0.0
    %120 = vmatprep.subr.mxu0 0.0
    %121 = vmatpush1.msra.mxu0 0.0
    %122 = vmatprep.subr.mxu0 0.0
    %123 = vmatpush1.msra.mxu0 0.0
    %124 = vmatprep.subr.mxu0 0.0
    %125 = vmatpush1.msra.mxu0 0.0
    %126 = vmatprep.subr.mxu0 0.0
    %127 = vmatpush1.msra.mxu0 0.0
    %128 = vmatprep.subr.mxu0 0.0
    %129 = vmatpush1.msra.mxu0 0.0
    %130 = vmatprep.subr.mxu0 0.0
    %131 = vmatpush1.msra.mxu0 0.0
    %132 = vmatprep.subr.mxu0 0.0
    %133 = vmatpush1.msra.mxu0 0.0
    %134 = vmatprep.subr.mxu0 0.0
    %135 = vmatpush1.msra.mxu0 0.0
    %136 = vmatprep.subr.mxu0 0.0
    %137 = vmatpush1.msra.mxu0 0.0
    %138 = vmatprep.subr.mxu0 0.0
    %139 = vmatpush1.msra.mxu0 0.0
    %140 = vmatprep.subr.mxu0 0.0
    %141 = vmatpush1.msra.mxu0 0.0
    %142 = vmatprep.subr.mxu0 0.0
    %143 = vmatpush1.msra.mxu0 0.0
    %144 = vmatprep.subr.mxu0 0.0
    %145 = vmatpush1.msra.mxu0 0.0
    %146 = vmatprep.subr.mxu0 0.0
    %147 = vmatpush1.msra.mxu0 0.0
    %148 = vmatprep.subr.mxu0 0.0
    %149 = vmatpush1.msra.mxu0 0.0
    %150 = vmatprep.subr.mxu0 0.0
    %151 = vmatpush1.msra.mxu0 0.0
    %152 = vmatprep.subr.mxu0 0.0
    %153 = vmatpush1.msra.mxu0 0.0
    %154 = vmatprep.subr.mxu0 0.0
    %155 = vmatpush1.msra.mxu0 0.0
    %156 = vmatprep.subr.mxu0 0.0
    %157 = vmatpush1.msra.mxu0 0.0
    %158 = vmatprep.subr.mxu0 0.0
    %159 = vmatpush1.msra.mxu0 0.0
    %160 = vmatprep.subr.mxu0 0.0
    %161 = vmatpush1.msra.mxu0 0.0
    %162 = vmatprep.subr.mxu0 0.0
    %163 = vmatpush1.msra.mxu0 0.0
    %164 = vmatprep.subr.mxu0 0.0
    %165 = vmatpush1.msra.mxu0 0.0
    %166 = vmatprep.subr.mxu0 0.0
    %167 = vmatpush1.msra.mxu0 0.0
    %168 = vmatprep.subr.mxu0 0.0
    %169 = vmatpush1.msra.mxu0 0.0
    %170 = vmatprep.mubr.f32.mxu0 0.0
    %171 = vmatmul.mubr.f32.gmra.mrb[0].mxu0 %v101
    %v172 = vpop.f32.mrb[0].mxu0
    %v173 = vadd.f32 %v97, %v172
    %v174 = vpop.f32.mrb[0].mxu0
    %175 = vmatprep.mubr.f32.mxu0 0.0
    %176 = vmatmul.mubr.f32.gmra.mrb[0].mxu0 %v104
    %v177 = vpop.f32.mrb[0].mxu0
    %v178 = vadd.f32 %v97, %v177
    %v179 = vpop.f32.mrb[0].mxu0
    %180 = vdwg.mxu0
    %v181 = vld [vmem:[%s2] sm:$0xff]
    %v182 = vld [vmem:[%s2 + $0x8] sm:$0xff]
    %v183 = vld [vmem:[%s2 + $0x10] sm:$0xff]
    %v184 = vld [vmem:[%s2 + $0x18] sm:$0xff]
    %vm185 = vcmask 261120
    %v187 = vsel %vm185, 0.0, 0
    %189 = vmatprep.subr.mxu0 0.0
    %190 = vmatpush1.msra.mxu0 %v181
    %191 = vmatprep.subr.mxu0 0.0
    %192 = vmatpush1.msra.mxu0 %v182
    %193 = vmatprep.subr.mxu0 0.0
    %194 = vmatpush1.msra.mxu0 %v183
    %195 = vmatprep.subr.mxu0 0.0
    %196 = vmatpush1.msra.mxu0 %v184
    %197 = vmatprep.subr.mxu0 0.0
    %198 = vmatpush1.msra.mxu0 0.0
    %199 = vmatprep.subr.mxu0 0.0
    %200 = vmatpush1.msra.mxu0 0.0
    %201 = vmatprep.subr.mxu0 0.0
    %202 = vmatpush1.msra.mxu0 0.0
    %203 = vmatprep.subr.mxu0 0.0
    %204 = vmatpush1.msra.mxu0 0.0
    %205 = vmatprep.subr.mxu0 0.0
    %206 = vmatpush1.msra.mxu0 0.0
    %207 = vmatprep.subr.mxu0 0.0
    %208 = vmatpush1.msra.mxu0 0.0
    %209 = vmatprep.subr.mxu0 0.0
    %210 = vmatpush1.msra.mxu0 0.0
    %211 = vmatprep.subr.mxu0 0.0
    %212 = vmatpush1.msra.mxu0 0.0
    %213 = vmatprep.subr.mxu0 0.0
    %214 = vmatpush1.msra.mxu0 0.0
    %215 = vmatprep.subr.mxu0 0.0
    %216 = vmatpush1.msra.mxu0 0.0
    %217 = vmatprep.subr.mxu0 0.0
    %218 = vmatpush1.msra.mxu0 0.0
    %219 = vmatprep.subr.mxu0 0.0
    %220 = vmatpush1.msra.mxu0 0.0
    %221 = vmatprep.subr.mxu0 0.0
    %222 = vmatpush1.msra.mxu0 0.0
    %223 = vmatprep.subr.mxu0 0.0
    %224 = vmatpush1.msra.mxu0 0.0
    %225 = vmatprep.subr.mxu0 0.0
    %226 = vmatpush1.msra.mxu0 0.0
    %227 = vmatprep.subr.mxu0 0.0
    %228 = vmatpush1.msra.mxu0 0.0
    %229 = vmatprep.subr.mxu0 0.0
    %230 = vmatpush1.msra.mxu0 0.0
    %231 = vmatprep.subr.mxu0 0.0
    %232 = vmatpush1.msra.mxu0 0.0
    %233 = vmatprep.subr.mxu0 0.0
    %234 = vmatpush1.msra.mxu0 0.0
    %235 = vmatprep.subr.mxu0 0.0
    %236 = vmatpush1.msra.mxu0 0.0
    %237 = vmatprep.subr.mxu0 0.0
    %238 = vmatpush1.msra.mxu0 0.0
    %239 = vmatprep.subr.mxu0 0.0
    %240 = vmatpush1.msra.mxu0 0.0
    %241 = vmatprep.subr.mxu0 0.0
    %242 = vmatpush1.msra.mxu0 0.0
    %243 = vmatprep.subr.mxu0 0.0
    %244 = vmatpush1.msra.mxu0 0.0
    %245 = vmatprep.subr.mxu0 0.0
    %246 = vmatpush1.msra.mxu0 0.0
    %247 = vmatprep.subr.mxu0 0.0
    %248 = vmatpush1.msra.mxu0 0.0
    %249 = vmatprep.subr.mxu0 0.0
    %250 = vmatpush1.msra.mxu0 0.0
    %251 = vmatprep.subr.mxu0 0.0
    %252 = vmatpush1.msra.mxu0 0.0
    %253 = vmatprep.mubr.f32.mxu0 0.0
    %254 = vmatmul.mubr.f32.gmra.mrb[0].mxu0 %v187
    %v255 = vpop.f32.mrb[0].mxu0
    %v256 = vadd.f32 0.0, %v255
    %v257 = vpop.f32.mrb[0].mxu0
    %258 = vdwg.mxu0
    %v259 = vadd.f32 %v173, %v256
    %v260 = vmul.f32 %v259, 0.5
    %v261 = vtanh.pop %v260
    %v262 = vmul.f32 %v261, 0.5
    %v263 = vadd.f32 %v262, 0.5
    %v264 = vtanh.pop %v259
    %v265 = vmul.f32 %v263, 0.0
    %267 = vrot.lane.b32.xlu0 %v264, 64
    %v268 = vpop.permute.xlu0 %267
    %v270 = vmul.f32 %v263, %v268
    %272 = vrot.lane.b32.xlu0 %v270, 32
    %v273 = vpop.permute.xlu0 %272
    %v275 = vadd.f32 %v265, %v273
    %v276 = vtanh.pop %v275
    %278 = vrot.lane.b32.xlu0 %v276, 64
    %v279 = vpop.permute.xlu0 %278
    %v281 = vmul.f32 %v263, %v279
    %283 = vrot.lane.b32.xlu0 %v281, 32
    %v284 = vpop.permute.xlu0 %283
    %vm286 = vcmask 254976
    %287 = vst.msk [vmem:[#allocation2] sm:$0x3] %vm286, %v284
    %v288 = vsel %vm185, %v284, 0
    %290 = vmatprep.subr.mxu0 0.0
    %291 = vmatpush1.msra.mxu0 %v181
    %292 = vmatprep.subr.mxu0 0.0
    %293 = vmatpush1.msra.mxu0 %v182
    %294 = vmatprep.subr.mxu0 0.0
    %295 = vmatpush1.msra.mxu0 %v183
    %296 = vmatprep.subr.mxu0 0.0
    %297 = vmatpush1.msra.mxu0 %v184
    %298 = vmatprep.subr.mxu0 0.0
    %299 = vmatpush1.msra.mxu0 0.0
    %300 = vmatprep.subr.mxu0 0.0
    %301 = vmatpush1.msra.mxu0 0.0
    %302 = vmatprep.subr.mxu0 0.0
    %303 = vmatpush1.msra.mxu0 0.0
    %304 = vmatprep.subr.mxu0 0.0
    %305 = vmatpush1.msra.mxu0 0.0
    %306 = vmatprep.subr.mxu0 0.0
    %307 = vmatpush1.msra.mxu0 0.0
    %308 = vmatprep.subr.mxu0 0.0
    %309 = vmatpush1.msra.mxu0 0.0
    %310 = vmatprep.subr.mxu0 0.0
    %311 = vmatpush1.msra.mxu0 0.0
    %312 = vmatprep.subr.mxu0 0.0
    %313 = vmatpush1.msra.mxu0 0.0
    %314 = vmatprep.subr.mxu0 0.0
    %315 = vmatpush1.msra.mxu0 0.0
    %316 = vmatprep.subr.mxu0 0.0
    %317 = vmatpush1.msra.mxu0 0.0
    %318 = vmatprep.subr.mxu0 0.0
    %319 = vmatpush1.msra.mxu0 0.0
    %320 = vmatprep.subr.mxu0 0.0
    %321 = vmatpush1.msra.mxu0 0.0
    %322 = vmatprep.subr.mxu0 0.0
    %323 = vmatpush1.msra.mxu0 0.0
    %324 = vmatprep.subr.mxu0 0.0
    %325 = vmatpush1.msra.mxu0 0.0
    %326 = vmatprep.subr.mxu0 0.0
    %327 = vmatpush1.msra.mxu0 0.0
    %328 = vmatprep.subr.mxu0 0.0
    %329 = vmatpush1.msra.mxu0 0.0
    %330 = vmatprep.subr.mxu0 0.0
    %331 = vmatpush1.msra.mxu0 0.0
    %332 = vmatprep.subr.mxu0 0.0
    %333 = vmatpush1.msra.mxu0 0.0
    %334 = vmatprep.subr.mxu0 0.0
    %335 = vmatpush1.msra.mxu0 0.0
    %336 = vmatprep.subr.mxu0 0.0
    %337 = vmatpush1.msra.mxu0 0.0
    %338 = vmatprep.subr.mxu0 0.0
    %339 = vmatpush1.msra.mxu0 0.0
    %340 = vmatprep.subr.mxu0 0.0
    %341 = vmatpush1.msra.mxu0 0.0
    %342 = vmatprep.subr.mxu0 0.0
    %343 = vmatpush1.msra.mxu0 0.0
    %344 = vmatprep.subr.mxu0 0.0
    %345 = vmatpush1.msra.mxu0 0.0
    %346 = vmatprep.subr.mxu0 0.0
    %347 = vmatpush1.msra.mxu0 0.0
    %348 = vmatprep.subr.mxu0 0.0
    %349 = vmatpush1.msra.mxu0 0.0
    %350 = vmatprep.subr.mxu0 0.0
    %351 = vmatpush1.msra.mxu0 0.0
    %352 = vmatprep.subr.mxu0 0.0
    %353 = vmatpush1.msra.mxu0 0.0
    %354 = vmatprep.mubr.f32.mxu0 0.0
    %355 = vmatmul.mubr.f32.gmra.mrb[0].mxu0 %v288
    %v356 = vpop.f32.mrb[0].mxu0
    %v357 = vadd.f32 0.0, %v356
    %v358 = vpop.f32.mrb[0].mxu0
    %359 = vdwg.mxu0
    %v361 = vrot.slane %v357, 6
    %v363 = vadd.f32 %v173, %v361
    %v364 = vmul.f32 %v363, 0.5
    %v365 = vtanh.pop %v364
    %v366 = vmul.f32 %v365, 0.5
    %v367 = vadd.f32 %v366, 0.5
    %v368 = vtanh.pop %v363
    %v370 = vrot.slane %v275, 6
    %v372 = vmul.f32 %v367, %v370
    %374 = vrot.lane.b32.xlu0 %v368, 64
    %v375 = vpop.permute.xlu0 %374
    %v377 = vmul.f32 %v367, %v375
    %379 = vrot.lane.b32.xlu0 %v377, 32
    %v380 = vpop.permute.xlu0 %379
    %v382 = vadd.f32 %v372, %v380
    %v383 = vtanh.pop %v382
    %385 = vrot.lane.b32.xlu0 %v383, 64
    %v386 = vpop.permute.xlu0 %385
    %v388 = vmul.f32 %v367, %v386
    %390 = vrot.lane.b32.xlu0 %v388, 32
    %v391 = vpop.permute.xlu0 %390
    %vm393 = vcmask 257026
    %394 = vst.msk [vmem:[#allocation2] sm:$0xc] %vm393, %v391
    %v395 = vrot.slane %v388, 2
    %396 = vrot.lane.b32.xlu0 %v395, 32
    %v397 = vpop.permute.xlu0 %396
    %v398 = vsel %vm185, %v397, 0
    %400 = vmatprep.subr.mxu0 0.0
    %401 = vmatpush1.msra.mxu0 %v181
    %402 = vmatprep.subr.mxu0 0.0
    %403 = vmatpush1.msra.mxu0 %v182
    %404 = vmatprep.subr.mxu0 0.0
    %405 = vmatpush1.msra.mxu0 %v183
    %406 = vmatprep.subr.mxu0 0.0
    %407 = vmatpush1.msra.mxu0 %v184
    %408 = vmatprep.subr.mxu0 0.0
    %409 = vmatpush1.msra.mxu0 0.0
    %410 = vmatprep.subr.mxu0 0.0
    %411 = vmatpush1.msra.mxu0 0.0
    %412 = vmatprep.subr.mxu0 0.0
    %413 = vmatpush1.msra.mxu0 0.0
    %414 = vmatprep.subr.mxu0 0.0
    %415 = vmatpush1.msra.mxu0 0.0
    %416 = vmatprep.subr.mxu0 0.0
    %417 = vmatpush1.msra.mxu0 0.0
    %418 = vmatprep.subr.mxu0 0.0
    %419 = vmatpush1.msra.mxu0 0.0
    %420 = vmatprep.subr.mxu0 0.0
    %421 = vmatpush1.msra.mxu0 0.0
    %422 = vmatprep.subr.mxu0 0.0
    %423 = vmatpush1.msra.mxu0 0.0
    %424 = vmatprep.subr.mxu0 0.0
    %425 = vmatpush1.msra.mxu0 0.0
    %426 = vmatprep.subr.mxu0 0.0
    %427 = vmatpush1.msra.mxu0 0.0
    %428 = vmatprep.subr.mxu0 0.0
    %429 = vmatpush1.msra.mxu0 0.0
    %430 = vmatprep.subr.mxu0 0.0
    %431 = vmatpush1.msra.mxu0 0.0
    %432 = vmatprep.subr.mxu0 0.0
    %433 = vmatpush1.msra.mxu0 0.0
    %434 = vmatprep.subr.mxu0 0.0
    %435 = vmatpush1.msra.mxu0 0.0
    %436 = vmatprep.subr.mxu0 0.0
    %437 = vmatpush1.msra.mxu0 0.0
    %438 = vmatprep.subr.mxu0 0.0
    %439 = vmatpush1.msra.mxu0 0.0
    %440 = vmatprep.subr.mxu0 0.0
    %441 = vmatpush1.msra.mxu0 0.0
    %442 = vmatprep.subr.mxu0 0.0
    %443 = vmatpush1.msra.mxu0 0.0
    %444 = vmatprep.subr.mxu0 0.0
    %445 = vmatpush1.msra.mxu0 0.0
    %446 = vmatprep.subr.mxu0 0.0
    %447 = vmatpush1.msra.mxu0 0.0
    %448 = vmatprep.subr.mxu0 0.0
    %449 = vmatpush1.msra.mxu0 0.0
    %450 = vmatprep.subr.mxu0 0.0
    %451 = vmatpush1.msra.mxu0 0.0
    %452 = vmatprep.subr.mxu0 0.0
    %453 = vmatpush1.msra.mxu0 0.0
    %454 = vmatprep.subr.mxu0 0.0
    %455 = vmatpush1.msra.mxu0 0.0
    %456 = vmatprep.subr.mxu0 0.0
    %457 = vmatpush1.msra.mxu0 0.0
    %458 = vmatprep.subr.mxu0 0.0
    %459 = vmatpush1.msra.mxu0 0.0
    %460 = vmatprep.subr.mxu0 0.0
    %461 = vmatpush1.msra.mxu0 0.0
    %462 = vmatprep.subr.mxu0 0.0
    %463 = vmatpush1.msra.mxu0 0.0
    %464 = vmatprep.mubr.f32.mxu0 0.0
    %465 = vmatmul.mubr.f32.gmra.mrb[0].mxu0 %v398
    %v466 = vpop.f32.mrb[0].mxu0
    %v467 = vadd.f32 0.0, %v466
    %v468 = vpop.f32.mrb[0].mxu0
    %469 = vdwg.mxu0
    %v471 = vrot.slane %v467, 4
    %v473 = vadd.f32 %v173, %v471
    %v474 = vmul.f32 %v473, 0.5
    %v475 = vtanh.pop %v474
    %v476 = vmul.f32 %v475, 0.5
    %v477 = vadd.f32 %v476, 0.5
    %v478 = vtanh.pop %v473
    %v480 = vrot.slane %v382, 6
    %v482 = vmul.f32 %v477, %v480
    %484 = vrot.lane.b32.xlu0 %v478, 64
    %v485 = vpop.permute.xlu0 %484
    %v487 = vmul.f32 %v477, %v485
    %489 = vrot.lane.b32.xlu0 %v487, 32
    %v490 = vpop.permute.xlu0 %489
    %v492 = vadd.f32 %v482, %v490
    %v493 = vtanh.pop %v492
    %495 = vrot.lane.b32.xlu0 %v493, 64
    %v496 = vpop.permute.xlu0 %495
    %v498 = vmul.f32 %v477, %v496
    %500 = vrot.lane.b32.xlu0 %v498, 32
    %v501 = vpop.permute.xlu0 %500
    %vm503 = vcmask 259076
    %504 = vst.msk [vmem:[#allocation2] sm:$0x30] %vm503, %v501
    %v505 = vrot.slane %v498, 4
    %506 = vrot.lane.b32.xlu0 %v505, 32
    %v507 = vpop.permute.xlu0 %506
    %v508 = vsel %vm185, %v507, 0
    %510 = vmatprep.subr.mxu0 0.0
    %511 = vmatpush1.msra.mxu0 %v181
    %512 = vmatprep.subr.mxu0 0.0
    %513 = vmatpush1.msra.mxu0 %v182
    %514 = vmatprep.subr.mxu0 0.0
    %515 = vmatpush1.msra.mxu0 %v183
    %516 = vmatprep.subr.mxu0 0.0
    %517 = vmatpush1.msra.mxu0 %v184
    %518 = vmatprep.subr.mxu0 0.0
    %519 = vmatpush1.msra.mxu0 0.0
    %520 = vmatprep.subr.mxu0 0.0
    %521 = vmatpush1.msra.mxu0 0.0
    %522 = vmatprep.subr.mxu0 0.0
    %523 = vmatpush1.msra.mxu0 0.0
    %524 = vmatprep.subr.mxu0 0.0
    %525 = vmatpush1.msra.mxu0 0.0
    %526 = vmatprep.subr.mxu0 0.0
    %527 = vmatpush1.msra.mxu0 0.0
    %528 = vmatprep.subr.mxu0 0.0
    %529 = vmatpush1.msra.mxu0 0.0
    %530 = vmatprep.subr.mxu0 0.0
    %531 = vmatpush1.msra.mxu0 0.0
    %532 = vmatprep.subr.mxu0 0.0
    %533 = vmatpush1.msra.mxu0 0.0
    %534 = vmatprep.subr.mxu0 0.0
    %535 = vmatpush1.msra.mxu0 0.0
    %536 = vmatprep.subr.mxu0 0.0
    %537 = vmatpush1.msra.mxu0 0.0
    %538 = vmatprep.subr.mxu0 0.0
    %539 = vmatpush1.msra.mxu0 0.0
    %540 = vmatprep.subr.mxu0 0.0
    %541 = vmatpush1.msra.mxu0 0.0
    %542 = vmatprep.subr.mxu0 0.0
    %543 = vmatpush1.msra.mxu0 0.0
    %544 = vmatprep.subr.mxu0 0.0
    %545 = vmatpush1.msra.mxu0 0.0
    %546 = vmatprep.subr.mxu0 0.0
    %547 = vmatpush1.msra.mxu0 0.0
    %548 = vmatprep.subr.mxu0 0.0
    %549 = vmatpush1.msra.mxu0 0.0
    %550 = vmatprep.subr.mxu0 0.0
    %551 = vmatpush1.msra.mxu0 0.0
    %552 = vmatprep.subr.mxu0 0.0
    %553 = vmatpush1.msra.mxu0 0.0
    %554 = vmatprep.subr.mxu0 0.0
    %555 = vmatpush1.msra.mxu0 0.0
    %556 = vmatprep.subr.mxu0 0.0
    %557 = vmatpush1.msra.mxu0 0.0
    %558 = vmatprep.subr.mxu0 0.0
    %559 = vmatpush1.msra.mxu0 0.0
    %560 = vmatprep.subr.mxu0 0.0
    %561 = vmatpush1.msra.mxu0 0.0
    %562 = vmatprep.subr.mxu0 0.0
    %563 = vmatpush1.msra.mxu0 0.0
    %564 = vmatprep.subr.mxu0 0.0
    %565 = vmatpush1.msra.mxu0 0.0
    %566 = vmatprep.subr.mxu0 0.0
    %567 = vmatpush1.msra.mxu0 0.0
    %568 = vmatprep.subr.mxu0 0.0
    %569 = vmatpush1.msra.mxu0 0.0
    %570 = vmatprep.subr.mxu0 0.0
    %571 = vmatpush1.msra.mxu0 0.0
    %572 = vmatprep.subr.mxu0 0.0
    %573 = vmatpush1.msra.mxu0 0.0
    %574 = vmatprep.mubr.f32.mxu0 0.0
    %575 = vmatmul.mubr.f32.gmra.mrb[0].mxu0 %v508
    %v576 = vpop.f32.mrb[0].mxu0
    %v577 = vadd.f32 0.0, %v576
    %v578 = vpop.f32.mrb[0].mxu0
    %579 = vdwg.mxu0
    %v581 = vrot.slane %v577, 2
    %v583 = vadd.f32 %v173, %v581
    %v584 = vmul.f32 %v583, 0.5
    %v585 = vtanh.pop %v584
    %v586 = vmul.f32 %v585, 0.5
    %v587 = vadd.f32 %v586, 0.5
    %v588 = vtanh.pop %v583
    %v590 = vrot.slane %v492, 6
    %v592 = vmul.f32 %v587, %v590
    %594 = vrot.lane.b32.xlu0 %v588, 64
    %v595 = vpop.permute.xlu0 %594
    %v597 = vmul.f32 %v587, %v595
    %599 = vrot.lane.b32.xlu0 %v597, 32
    %v600 = vpop.permute.xlu0 %599
    %v602 = vadd.f32 %v592, %v600
    %v603 = vtanh.pop %v602
    %605 = vrot.lane.b32.xlu0 %v603, 64
    %v606 = vpop.permute.xlu0 %605
    %v608 = vmul.f32 %v587, %v606
    %610 = vrot.lane.b32.xlu0 %v608, 32
    %v611 = vpop.permute.xlu0 %610
    %vm613 = vcmask 261126
    %614 = vst.msk [vmem:[#allocation2] sm:$0xc0] %vm613, %v611
    %v615 = vrot.slane %v608, 6
    %616 = vrot.lane.b32.xlu0 %v615, 32
    %v617 = vpop.permute.xlu0 %616
    %v618 = vsel %vm185, %v617, 0
    %620 = vmatprep.subr.mxu0 0.0
    %621 = vmatpush1.msra.mxu0 %v181
    %622 = vmatprep.subr.mxu0 0.0
    %623 = vmatpush1.msra.mxu0 %v182
    %624 = vmatprep.subr.mxu0 0.0
    %625 = vmatpush1.msra.mxu0 %v183
    %626 = vmatprep.subr.mxu0 0.0
    %627 = vmatpush1.msra.mxu0 %v184
    %628 = vmatprep.subr.mxu0 0.0
    %629 = vmatpush1.msra.mxu0 0.0
    %630 = vmatprep.subr.mxu0 0.0
    %631 = vmatpush1.msra.mxu0 0.0
    %632 = vmatprep.subr.mxu0 0.0
    %633 = vmatpush1.msra.mxu0 0.0
    %634 = vmatprep.subr.mxu0 0.0
    %635 = vmatpush1.msra.mxu0 0.0
    %636 = vmatprep.subr.mxu0 0.0
    %637 = vmatpush1.msra.mxu0 0.0
    %638 = vmatprep.subr.mxu0 0.0
    %639 = vmatpush1.msra.mxu0 0.0
    %640 = vmatprep.subr.mxu0 0.0
    %641 = vmatpush1.msra.mxu0 0.0
    %642 = vmatprep.subr.mxu0 0.0
    %643 = vmatpush1.msra.mxu0 0.0
    %644 = vmatprep.subr.mxu0 0.0
    %645 = vmatpush1.msra.mxu0 0.0
    %646 = vmatprep.subr.mxu0 0.0
    %647 = vmatpush1.msra.mxu0 0.0
    %648 = vmatprep.subr.mxu0 0.0
    %649 = vmatpush1.msra.mxu0 0.0
    %650 = vmatprep.subr.mxu0 0.0
    %651 = vmatpush1.msra.mxu0 0.0
    %652 = vmatprep.subr.mxu0 0.0
    %653 = vmatpush1.msra.mxu0 0.0
    %654 = vmatprep.subr.mxu0 0.0
    %655 = vmatpush1.msra.mxu0 0.0
    %656 = vmatprep.subr.mxu0 0.0
    %657 = vmatpush1.msra.mxu0 0.0
    %658 = vmatprep.subr.mxu0 0.0
    %659 = vmatpush1.msra.mxu0 0.0
    %660 = vmatprep.subr.mxu0 0.0
    %661 = vmatpush1.msra.mxu0 0.0
    %662 = vmatprep.subr.mxu0 0.0
    %663 = vmatpush1.msra.mxu0 0.0
    %664 = vmatprep.subr.mxu0 0.0
    %665 = vmatpush1.msra.mxu0 0.0
    %666 = vmatprep.subr.mxu0 0.0
    %667 = vmatpush1.msra.mxu0 0.0
    %668 = vmatprep.subr.mxu0 0.0
    %669 = vmatpush1.msra.mxu0 0.0
    %670 = vmatprep.subr.mxu0 0.0
    %671 = vmatpush1.msra.mxu0 0.0
    %672 = vmatprep.subr.mxu0 0.0
    %673 = vmatpush1.msra.mxu0 0.0
    %674 = vmatprep.subr.mxu0 0.0
    %675 = vmatpush1.msra.mxu0 0.0
    %676 = vmatprep.subr.mxu0 0.0
    %677 = vmatpush1.msra.mxu0 0.0
    %678 = vmatprep.subr.mxu0 0.0
    %679 = vmatpush1.msra.mxu0 0.0
    %680 = vmatprep.subr.mxu0 0.0
    %681 = vmatpush1.msra.mxu0 0.0
    %682 = vmatprep.subr.mxu0 0.0
    %683 = vmatpush1.msra.mxu0 0.0
    %684 = vmatprep.mubr.f32.mxu0 0.0
    %685 = vmatmul.mubr.f32.gmra.mrb[0].mxu0 %v618
    %v686 = vpop.f32.mrb[0].mxu0
    %v687 = vadd.f32 0.0, %v686
    %v688 = vpop.f32.mrb[0].mxu0
    %689 = vdwg.mxu0
    %v690 = vadd.f32 %v178, %v687
    %v691 = vmul.f32 %v690, 0.5
    %v692 = vtanh.pop %v691
    %v693 = vmul.f32 %v692, 0.5
    %v694 = vadd.f32 %v693, 0.5
    %v695 = vtanh.pop %v690
    %v697 = vrot.slane %v602, 6
    %v699 = vmul.f32 %v694, %v697
    %701 = vrot.lane.b32.xlu0 %v695, 64
    %v702 = vpop.permute.xlu0 %701
    %v704 = vmul.f32 %v694, %v702
    %706 = vrot.lane.b32.xlu0 %v704, 32
    %v707 = vpop.permute.xlu0 %706
    %v709 = vadd.f32 %v699, %v707
    %v710 = vtanh.pop %v709
    %712 = vrot.lane.b32.xlu0 %v710, 64
    %v713 = vpop.permute.xlu0 %712
    %v715 = vmul.f32 %v694, %v713
    %717 = vrot.lane.b32.xlu0 %v715, 32
    %v718 = vpop.permute.xlu0 %717
    %720 = vst.msk [vmem:[#allocation2 + $0x8] sm:$0x3] %vm286, %v718
    %v721 = vsel %vm185, %v718, 0
    %723 = vmatprep.subr.mxu0 0.0
    %724 = vmatpush1.msra.mxu0 %v181
    %725 = vmatprep.subr.mxu0 0.0
    %726 = vmatpush1.msra.mxu0 %v182
    %727 = vmatprep.subr.mxu0 0.0
    %728 = vmatpush1.msra.mxu0 %v183
    %729 = vmatprep.subr.mxu0 0.0
    %730 = vmatpush1.msra.mxu0 %v184
    %731 = vmatprep.subr.mxu0 0.0
    %732 = vmatpush1.msra.mxu0 0.0
    %733 = vmatprep.subr.mxu0 0.0
    %734 = vmatpush1.msra.mxu0 0.0
    %735 = vmatprep.subr.mxu0 0.0
    %736 = vmatpush1.msra.mxu0 0.0
    %737 = vmatprep.subr.mxu0 0.0
    %738 = vmatpush1.msra.mxu0 0.0
    %739 = vmatprep.subr.mxu0 0.0
    %740 = vmatpush1.msra.mxu0 0.0
    %741 = vmatprep.subr.mxu0 0.0
    %742 = vmatpush1.msra.mxu0 0.0
    %743 = vmatprep.subr.mxu0 0.0
    %744 = vmatpush1.msra.mxu0 0.0
    %745 = vmatprep.subr.mxu0 0.0
    %746 = vmatpush1.msra.mxu0 0.0
    %747 = vmatprep.subr.mxu0 0.0
    %748 = vmatpush1.msra.mxu0 0.0
    %749 = vmatprep.subr.mxu0 0.0
    %750 = vmatpush1.msra.mxu0 0.0
    %751 = vmatprep.subr.mxu0 0.0
    %752 = vmatpush1.msra.mxu0 0.0
    %753 = vmatprep.subr.mxu0 0.0
    %754 = vmatpush1.msra.mxu0 0.0
    %755 = vmatprep.subr.mxu0 0.0
    %756 = vmatpush1.msra.mxu0 0.0
    %757 = vmatprep.subr.mxu0 0.0
    %758 = vmatpush1.msra.mxu0 0.0
    %759 = vmatprep.subr.mxu0 0.0
    %760 = vmatpush1.msra.mxu0 0.0
    %761 = vmatprep.subr.mxu0 0.0
    %762 = vmatpush1.msra.mxu0 0.0
    %763 = vmatprep.subr.mxu0 0.0
    %764 = vmatpush1.msra.mxu0 0.0
    %765 = vmatprep.subr.mxu0 0.0
    %766 = vmatpush1.msra.mxu0 0.0
    %767 = vmatprep.subr.mxu0 0.0
    %768 = vmatpush1.msra.mxu0 0.0
    %769 = vmatprep.subr.mxu0 0.0
    %770 = vmatpush1.msra.mxu0 0.0
    %771 = vmatprep.subr.mxu0 0.0
    %772 = vmatpush1.msra.mxu0 0.0
    %773 = vmatprep.subr.mxu0 0.0
    %774 = vmatpush1.msra.mxu0 0.0
    %775 = vmatprep.subr.mxu0 0.0
    %776 = vmatpush1.msra.mxu0 0.0
    %777 = vmatprep.subr.mxu0 0.0
    %778 = vmatpush1.msra.mxu0 0.0
    %779 = vmatprep.subr.mxu0 0.0
    %780 = vmatpush1.msra.mxu0 0.0
    %781 = vmatprep.subr.mxu0 0.0
    %782 = vmatpush1.msra.mxu0 0.0
    %783 = vmatprep.subr.mxu0 0.0
    %784 = vmatpush1.msra.mxu0 0.0
    %785 = vmatprep.subr.mxu0 0.0
    %786 = vmatpush1.msra.mxu0 0.0
    %787 = vmatprep.mubr.f32.mxu0 0.0
    %788 = vmatmul.mubr.f32.gmra.mrb[0].mxu0 %v721
    %v789 = vpop.f32.mrb[0].mxu0
    %v790 = vadd.f32 0.0, %v789
    %v791 = vpop.f32.mrb[0].mxu0
    %792 = vdwg.mxu0
    %v794 = vrot.slane %v790, 6
    %v796 = vadd.f32 %v178, %v794
    %v797 = vmul.f32 %v796, 0.5
    %v798 = vtanh.pop %v797
    %v799 = vmul.f32 %v798, 0.5
    %v800 = vadd.f32 %v799, 0.5
    %v801 = vtanh.pop %v796
    %v803 = vrot.slane %v709, 6
    %v805 = vmul.f32 %v800, %v803
    %807 = vrot.lane.b32.xlu0 %v801, 64
    %v808 = vpop.permute.xlu0 %807
    %v810 = vmul.f32 %v800, %v808
    %812 = vrot.lane.b32.xlu0 %v810, 32
    %v813 = vpop.permute.xlu0 %812
    %v815 = vadd.f32 %v805, %v813
    %v816 = vtanh.pop %v815
    %818 = vrot.lane.b32.xlu0 %v816, 64
    %v819 = vpop.permute.xlu0 %818
    %v821 = vmul.f32 %v800, %v819
    %823 = vrot.lane.b32.xlu0 %v821, 32
    %v824 = vpop.permute.xlu0 %823
    %826 = vst.msk [vmem:[#allocation2 + $0x8] sm:$0xc] %vm393, %v824
    %v827 = vrot.slane %v821, 2
    %828 = vrot.lane.b32.xlu0 %v827, 32
    %v829 = vpop.permute.xlu0 %828
    %v830 = vsel %vm185, %v829, 0
    %832 = vmatprep.subr.mxu0 0.0
    %833 = vmatpush1.msra.mxu0 %v181
    %834 = vmatprep.subr.mxu0 0.0
    %835 = vmatpush1.msra.mxu0 %v182
    %836 = vmatprep.subr.mxu0 0.0
    %837 = vmatpush1.msra.mxu0 %v183
    %838 = vmatprep.subr.mxu0 0.0
    %839 = vmatpush1.msra.mxu0 %v184
    %840 = vmatprep.subr.mxu0 0.0
    %841 = vmatpush1.msra.mxu0 0.0
    %842 = vmatprep.subr.mxu0 0.0
    %843 = vmatpush1.msra.mxu0 0.0
    %844 = vmatprep.subr.mxu0 0.0
    %845 = vmatpush1.msra.mxu0 0.0
    %846 = vmatprep.subr.mxu0 0.0
    %847 = vmatpush1.msra.mxu0 0.0
    %848 = vmatprep.subr.mxu0 0.0
    %849 = vmatpush1.msra.mxu0 0.0
    %850 = vmatprep.subr.mxu0 0.0
    %851 = vmatpush1.msra.mxu0 0.0
    %852 = vmatprep.subr.mxu0 0.0
    %853 = vmatpush1.msra.mxu0 0.0
    %854 = vmatprep.subr.mxu0 0.0
    %855 = vmatpush1.msra.mxu0 0.0
    %856 = vmatprep.subr.mxu0 0.0
    %857 = vmatpush1.msra.mxu0 0.0
    %858 = vmatprep.subr.mxu0 0.0
    %859 = vmatpush1.msra.mxu0 0.0
    %860 = vmatprep.subr.mxu0 0.0
    %861 = vmatpush1.msra.mxu0 0.0
    %862 = vmatprep.subr.mxu0 0.0
    %863 = vmatpush1.msra.mxu0 0.0
    %864 = vmatprep.subr.mxu0 0.0
    %865 = vmatpush1.msra.mxu0 0.0
    %866 = vmatprep.subr.mxu0 0.0
    %867 = vmatpush1.msra.mxu0 0.0
    %868 = vmatprep.subr.mxu0 0.0
    %869 = vmatpush1.msra.mxu0 0.0
    %870 = vmatprep.subr.mxu0 0.0
    %871 = vmatpush1.msra.mxu0 0.0
    %872 = vmatprep.subr.mxu0 0.0
    %873 = vmatpush1.msra.mxu0 0.0
    %874 = vmatprep.subr.mxu0 0.0
    %875 = vmatpush1.msra.mxu0 0.0
    %876 = vmatprep.subr.mxu0 0.0
    %877 = vmatpush1.msra.mxu0 0.0
    %878 = vmatprep.subr.mxu0 0.0
    %879 = vmatpush1.msra.mxu0 0.0
    %880 = vmatprep.subr.mxu0 0.0
    %881 = vmatpush1.msra.mxu0 0.0
    %882 = vmatprep.subr.mxu0 0.0
    %883 = vmatpush1.msra.mxu0 0.0
    %884 = vmatprep.subr.mxu0 0.0
    %885 = vmatpush1.msra.mxu0 0.0
    %886 = vmatprep.subr.mxu0 0.0
    %887 = vmatpush1.msra.mxu0 0.0
    %888 = vmatprep.subr.mxu0 0.0
    %889 = vmatpush1.msra.mxu0 0.0
    %890 = vmatprep.subr.mxu0 0.0
    %891 = vmatpush1.msra.mxu0 0.0
    %892 = vmatprep.subr.mxu0 0.0
    %893 = vmatpush1.msra.mxu0 0.0
    %894 = vmatprep.subr.mxu0 0.0
    %895 = vmatpush1.msra.mxu0 0.0
    %896 = vmatprep.mubr.f32.mxu0 0.0
    %897 = vmatmul.mubr.f32.gmra.mrb[0].mxu0 %v830
    %v898 = vpop.f32.mrb[0].mxu0
    %v899 = vadd.f32 0.0, %v898
    %v900 = vpop.f32.mrb[0].mxu0
    %901 = vdwg.mxu0
    %v903 = vrot.slane %v899, 4
    %v905 = vadd.f32 %v178, %v903
    %v906 = vmul.f32 %v905, 0.5
    %v907 = vtanh.pop %v906
    %v908 = vmul.f32 %v907, 0.5
    %v909 = vadd.f32 %v908, 0.5
    %v910 = vtanh.pop %v905
    %v912 = vrot.slane %v815, 6
    %v914 = vmul.f32 %v909, %v912
    %916 = vrot.lane.b32.xlu0 %v910, 64
    %v917 = vpop.permute.xlu0 %916
    %v919 = vmul.f32 %v909, %v917
    %921 = vrot.lane.b32.xlu0 %v919, 32
    %v922 = vpop.permute.xlu0 %921
    %v924 = vadd.f32 %v914, %v922
    %v925 = vtanh.pop %v924
    %927 = vrot.lane.b32.xlu0 %v925, 64
    %v928 = vpop.permute.xlu0 %927
    %v930 = vmul.f32 %v909, %v928
    %932 = vrot.lane.b32.xlu0 %v930, 32
    %v933 = vpop.permute.xlu0 %932
    %935 = vst.msk [vmem:[#allocation2 + $0x8] sm:$0x30] %vm503, %v933
    %v936 = vrot.slane %v930, 4
    %937 = vrot.lane.b32.xlu0 %v936, 32
    %v938 = vpop.permute.xlu0 %937
    %v939 = vsel %vm185, %v938, 0
    %941 = vmatprep.subr.mxu0 0.0
    %942 = vmatpush1.msra.mxu0 %v181
    %943 = vmatprep.subr.mxu0 0.0
    %944 = vmatpush1.msra.mxu0 %v182
    %945 = vmatprep.subr.mxu0 0.0
    %946 = vmatpush1.msra.mxu0 %v183
    %947 = vmatprep.subr.mxu0 0.0
    %948 = vmatpush1.msra.mxu0 %v184
    %949 = vmatprep.subr.mxu0 0.0
    %950 = vmatpush1.msra.mxu0 0.0
    %951 = vmatprep.subr.mxu0 0.0
    %952 = vmatpush1.msra.mxu0 0.0
    %953 = vmatprep.subr.mxu0 0.0
    %954 = vmatpush1.msra.mxu0 0.0
    %955 = vmatprep.subr.mxu0 0.0
    %956 = vmatpush1.msra.mxu0 0.0
    %957 = vmatprep.subr.mxu0 0.0
    %958 = vmatpush1.msra.mxu0 0.0
    %959 = vmatprep.subr.mxu0 0.0
    %960 = vmatpush1.msra.mxu0 0.0
    %961 = vmatprep.subr.mxu0 0.0
    %962 = vmatpush1.msra.mxu0 0.0
    %963 = vmatprep.subr.mxu0 0.0
    %964 = vmatpush1.msra.mxu0 0.0
    %965 = vmatprep.subr.mxu0 0.0
    %966 = vmatpush1.msra.mxu0 0.0
    %967 = vmatprep.subr.mxu0 0.0
    %968 = vmatpush1.msra.mxu0 0.0
    %969 = vmatprep.subr.mxu0 0.0
    %970 = vmatpush1.msra.mxu0 0.0
    %971 = vmatprep.subr.mxu0 0.0
    %972 = vmatpush1.msra.mxu0 0.0
    %973 = vmatprep.subr.mxu0 0.0
    %974 = vmatpush1.msra.mxu0 0.0
    %975 = vmatprep.subr.mxu0 0.0
    %976 = vmatpush1.msra.mxu0 0.0
    %977 = vmatprep.subr.mxu0 0.0
    %978 = vmatpush1.msra.mxu0 0.0
    %979 = vmatprep.subr.mxu0 0.0
    %980 = vmatpush1.msra.mxu0 0.0
    %981 = vmatprep.subr.mxu0 0.0
    %982 = vmatpush1.msra.mxu0 0.0
    %983 = vmatprep.subr.mxu0 0.0
    %984 = vmatpush1.msra.mxu0 0.0
    %985 = vmatprep.subr.mxu0 0.0
    %986 = vmatpush1.msra.mxu0 0.0
    %987 = vmatprep.subr.mxu0 0.0
    %988 = vmatpush1.msra.mxu0 0.0
    %989 = vmatprep.subr.mxu0 0.0
    %990 = vmatpush1.msra.mxu0 0.0
    %991 = vmatprep.subr.mxu0 0.0
    %992 = vmatpush1.msra.mxu0 0.0
    %993 = vmatprep.subr.mxu0 0.0
    %994 = vmatpush1.msra.mxu0 0.0
    %995 = vmatprep.subr.mxu0 0.0
    %996 = vmatpush1.msra.mxu0 0.0
    %997 = vmatprep.subr.mxu0 0.0
    %998 = vmatpush1.msra.mxu0 0.0
    %999 = vmatprep.subr.mxu0 0.0
    %1000 = vmatpush1.msra.mxu0 0.0
    %1001 = vmatprep.subr.mxu0 0.0
    %1002 = vmatpush1.msra.mxu0 0.0
    %1003 = vmatprep.subr.mxu0 0.0
    %1004 = vmatpush1.msra.mxu0 0.0
    %1005 = vmatprep.mubr.f32.mxu0 0.0
    %1006 = vmatmul.mubr.f32.gmra.mrb[0].mxu0 %v939
    %v1007 = vpop.f32.mrb[0].mxu0
    %v1008 = vadd.f32 0.0, %v1007
    %v1009 = vpop.f32.mrb[0].mxu0
    %1010 = vdwg.mxu0
    %v1012 = vrot.slane %v1008, 2
    %v1014 = vadd.f32 %v178, %v1012
    %v1015 = vmul.f32 %v1014, 0.5
    %v1016 = vtanh.pop %v1015
    %v1017 = vmul.f32 %v1016, 0.5
    %v1018 = vadd.f32 %v1017, 0.5
    %v1019 = vtanh.pop %v1014
    %v1021 = vrot.slane %v924, 6
    %v1023 = vmul.f32 %v1018, %v1021
    %1025 = vrot.lane.b32.xlu0 %v1019, 64
    %v1026 = vpop.permute.xlu0 %1025
    %v1028 = vmul.f32 %v1018, %v1026
    %1030 = vrot.lane.b32.xlu0 %v1028, 32
    %v1031 = vpop.permute.xlu0 %1030
    %v1033 = vadd.f32 %v1023, %v1031
    %v1034 = vtanh.pop %v1033
    %1036 = vrot.lane.b32.xlu0 %v1034, 64
    %v1037 = vpop.permute.xlu0 %1036
    %v1039 = vmul.f32 %v1018, %v1037
    %1041 = vrot.lane.b32.xlu0 %v1039, 32
    %v1042 = vpop.permute.xlu0 %1041
    %1044 = vst.msk [vmem:[#allocation2 + $0x8] sm:$0xc0] %vm613, %v1042
    %v1045 = vld [vmem:[#allocation2] sm:$0xff]
    %v1046 = vld [vmem:[#allocation2 + $0x8] sm:$0xff]
    %v1047 = vld [vmem:[#allocation8] sm:$0xff]
    %v1048 = vld [vmem:[#allocation8 + $0x8] sm:$0xff]
    %v1049 = vld [vmem:[#allocation8 + $0x10] sm:$0xff]
    %v1050 = vld [vmem:[#allocation8 + $0x18] sm:$0xff]
    %v1051 = vld [vmem:[%s6] sm:$0x1]
    %v1053 = vlaneseq
    %v1054 = vshrl.u32 %v1053, 7
    %v1055 = vsub.s32 0, %v1054
    %v1056 = vrot.slane %v1051, %v1055
    %v1059 = vsel %vm185, %v1045, 0
    %v1062 = vsel %vm185, %v1046, 0
    %1064 = vmatprep.subr.mxu0 0.0
    %1065 = vmatpush1.msra.mxu0 %v1047
    %1066 = vmatprep.subr.mxu0 0.0
    %1067 = vmatpush1.msra.mxu0 %v1048
    %1068 = vmatprep.subr.mxu0 0.0
    %1069 = vmatpush1.msra.mxu0 %v1049
    %1070 = vmatprep.subr.mxu0 0.0
    %1071 = vmatpush1.msra.mxu0 %v1050
    %1072 = vmatprep.subr.mxu0 0.0
    %1073 = vmatpush1.msra.mxu0 0.0
    %1074 = vmatprep.subr.mxu0 0.0
    %1075 = vmatpush1.msra.mxu0 0.0
    %1076 = vmatprep.subr.mxu0 0.0
    %1077 = vmatpush1.msra.mxu0 0.0
    %1078 = vmatprep.subr.mxu0 0.0
    %1079 = vmatpush1.msra.mxu0 0.0
    %1080 = vmatprep.subr.mxu0 0.0
    %1081 = vmatpush1.msra.mxu0 0.0
    %1082 = vmatprep.subr.mxu0 0.0
    %1083 = vmatpush1.msra.mxu0 0.0
    %1084 = vmatprep.subr.mxu0 0.0
    %1085 = vmatpush1.msra.mxu0 0.0
    %1086 = vmatprep.subr.mxu0 0.0
    %1087 = vmatpush1.msra.mxu0 0.0
    %1088 = vmatprep.subr.mxu0 0.0
    %1089 = vmatpush1.msra.mxu0 0.0
    %1090 = vmatprep.subr.mxu0 0.0
    %1091 = vmatpush1.msra.mxu0 0.0
    %1092 = vmatprep.subr.mxu0 0.0
    %1093 = vmatpush1.msra.mxu0 0.0
    %1094 = vmatprep.subr.mxu0 0.0
    %1095 = vmatpush1.msra.mxu0 0.0
    %1096 = vmatprep.subr.mxu0 0.0
    %1097 = vmatpush1.msra.mxu0 0.0
    %1098 = vmatprep.subr.mxu0 0.0
    %1099 = vmatpush1.msra.mxu0 0.0
    %1100 = vmatprep.subr.mxu0 0.0
    %1101 = vmatpush1.msra.mxu0 0.0
    %1102 = vmatprep.subr.mxu0 0.0
    %1103 = vmatpush1.msra.mxu0 0.0
    %1104 = vmatprep.subr.mxu0 0.0
    %1105 = vmatpush1.msra.mxu0 0.0
    %1106 = vmatprep.subr.mxu0 0.0
    %1107 = vmatpush1.msra.mxu0 0.0
    %1108 = vmatprep.subr.mxu0 0.0
    %1109 = vmatpush1.msra.mxu0 0.0
    %1110 = vmatprep.subr.mxu0 0.0
    %1111 = vmatpush1.msra.mxu0 0.0
    %1112 = vmatprep.subr.mxu0 0.0
    %1113 = vmatpush1.msra.mxu0 0.0
    %1114 = vmatprep.subr.mxu0 0.0
    %1115 = vmatpush1.msra.mxu0 0.0
    %1116 = vmatprep.subr.mxu0 0.0
    %1117 = vmatpush1.msra.mxu0 0.0
    %1118 = vmatprep.subr.mxu0 0.0
    %1119 = vmatpush1.msra.mxu0 0.0
    %1120 = vmatprep.subr.mxu0 0.0
    %1121 = vmatpush1.msra.mxu0 0.0
    %1122 = vmatprep.subr.mxu0 0.0
    %1123 = vmatpush1.msra.mxu0 0.0
    %1124 = vmatprep.subr.mxu0 0.0
    %1125 = vmatpush1.msra.mxu0 0.0
    %1126 = vmatprep.subr.mxu0 0.0
    %1127 = vmatpush1.msra.mxu0 0.0
    %1128 = vmatprep.mubr.f32.mxu0 0.0
    %1129 = vmatmul.mubr.f32.gmra.mrb[0].mxu0 %v1059
    %v1130 = vpop.f32.mrb[0].mxu0
    %v1131 = vadd.f32 %v1056, %v1130
    %v1132 = vpop.f32.mrb[0].mxu0
    %1133 = vmatprep.mubr.f32.mxu0 0.0
    %1134 = vmatmul.mubr.f32.gmra.mrb[0].mxu0 %v1062
    %v1135 = vpop.f32.mrb[0].mxu0
    %v1136 = vadd.f32 %v1056, %v1135
    %v1137 = vpop.f32.mrb[0].mxu0
    %1138 = vdwg.mxu0
    %v1139 = vld [vmem:[#allocation9] sm:$0xff]
    %v1140 = vld [vmem:[#allocation9 + $0x8] sm:$0xff]
    %v1141 = vld [vmem:[#allocation9 + $0x10] sm:$0xff]
    %v1142 = vld [vmem:[#allocation9 + $0x18] sm:$0xff]
    %1143 = vmatprep.subr.mxu0 0.0
    %1144 = vmatpush1.msra.mxu0 %v1139
    %1145 = vmatprep.subr.mxu0 0.0
    %1146 = vmatpush1.msra.mxu0 %v1140
    %1147 = vmatprep.subr.mxu0 0.0
    %1148 = vmatpush1.msra.mxu0 %v1141
    %1149 = vmatprep.subr.mxu0 0.0
    %1150 = vmatpush1.msra.mxu0 %v1142
    %1151 = vmatprep.subr.mxu0 0.0
    %1152 = vmatpush1.msra.mxu0 0.0
    %1153 = vmatprep.subr.mxu0 0.0
    %1154 = vmatpush1.msra.mxu0 0.0
    %1155 = vmatprep.subr.mxu0 0.0
    %1156 = vmatpush1.msra.mxu0 0.0
    %1157 = vmatprep.subr.mxu0 0.0
    %1158 = vmatpush1.msra.mxu0 0.0
    %1159 = vmatprep.subr.mxu0 0.0
    %1160 = vmatpush1.msra.mxu0 0.0
    %1161 = vmatprep.subr.mxu0 0.0
    %1162 = vmatpush1.msra.mxu0 0.0
    %1163 = vmatprep.subr.mxu0 0.0
    %1164 = vmatpush1.msra.mxu0 0.0
    %1165 = vmatprep.subr.mxu0 0.0
    %1166 = vmatpush1.msra.mxu0 0.0
    %1167 = vmatprep.subr.mxu0 0.0
    %1168 = vmatpush1.msra.mxu0 0.0
    %1169 = vmatprep.subr.mxu0 0.0
    %1170 = vmatpush1.msra.mxu0 0.0
    %1171 = vmatprep.subr.mxu0 0.0
    %1172 = vmatpush1.msra.mxu0 0.0
    %1173 = vmatprep.subr.mxu0 0.0
    %1174 = vmatpush1.msra.mxu0 0.0
    %1175 = vmatprep.subr.mxu0 0.0
    %1176 = vmatpush1.msra.mxu0 0.0
    %1177 = vmatprep.subr.mxu0 0.0
    %1178 = vmatpush1.msra.mxu0 0.0
    %1179 = vmatprep.subr.mxu0 0.0
    %1180 = vmatpush1.msra.mxu0 0.0
    %1181 = vmatprep.subr.mxu0 0.0
    %1182 = vmatpush1.msra.mxu0 0.0
    %1183 = vmatprep.subr.mxu0 0.0
    %1184 = vmatpush1.msra.mxu0 0.0
    %1185 = vmatprep.subr.mxu0 0.0
    %1186 = vmatpush1.msra.mxu0 0.0
    %1187 = vmatprep.subr.mxu0 0.0
    %1188 = vmatpush1.msra.mxu0 0.0
    %1189 = vmatprep.subr.mxu0 0.0
    %1190 = vmatpush1.msra.mxu0 0.0
    %1191 = vmatprep.subr.mxu0 0.0
    %1192 = vmatpush1.msra.mxu0 0.0
    %1193 = vmatprep.subr.mxu0 0.0
    %1194 = vmatpush1.msra.mxu0 0.0
    %1195 = vmatprep.subr.mxu0 0.0
    %1196 = vmatpush1.msra.mxu0 0.0
    %1197 = vmatprep.subr.mxu0 0.0
    %1198 = vmatpush1.msra.mxu0 0.0
    %1199 = vmatprep.subr.mxu0 0.0
    %1200 = vmatpush1.msra.mxu0 0.0
    %1201 = vmatprep.subr.mxu0 0.0
    %1202 = vmatpush1.msra.mxu0 0.0
    %1203 = vmatprep.subr.mxu0 0.0
    %1204 = vmatpush1.msra.mxu0 0.0
    %1205 = vmatprep.subr.mxu0 0.0
    %1206 = vmatpush1.msra.mxu0 0.0
    %1207 = vmatprep.mubr.f32.mxu0 0.0
    %1208 = vmatmul.mubr.f32.gmra.mrb[0].mxu0 %v187
    %v1209 = vpop.f32.mrb[0].mxu0
    %v1210 = vadd.f32 0.0, %v1209
    %v1211 = vpop.f32.mrb[0].mxu0
    %1212 = vdwg.mxu0
    %v1213 = vadd.f32 %v1131, %v1210
    %v1214 = vmul.f32 %v1213, 0.5
    %v1215 = vtanh.pop %v1214
    %v1216 = vmul.f32 %v1215, 0.5
    %v1217 = vadd.f32 %v1216, 0.5
    %v1218 = vtanh.pop %v1213
    %v1219 = vmul.f32 %v1217, 0.0
    %1221 = vrot.lane.b32.xlu0 %v1218, 64
    %v1222 = vpop.permute.xlu0 %1221
    %v1224 = vmul.f32 %v1217, %v1222
    %1226 = vrot.lane.b32.xlu0 %v1224, 32
    %v1227 = vpop.permute.xlu0 %1226
    %v1229 = vadd.f32 %v1219, %v1227
    %v1230 = vtanh.pop %v1229
    %1232 = vrot.lane.b32.xlu0 %v1230, 64
    %v1233 = vpop.permute.xlu0 %1232
    %v1235 = vmul.f32 %v1217, %v1233
    %1237 = vrot.lane.b32.xlu0 %v1235, 32
    %v1238 = vpop.permute.xlu0 %1237
    %v1239 = vsel %vm185, %v1238, 0
    %1241 = vmatprep.subr.mxu0 0.0
    %1242 = vmatpush1.msra.mxu0 %v1139
    %1243 = vmatprep.subr.mxu0 0.0
    %1244 = vmatpush1.msra.mxu0 %v1140
    %1245 = vmatprep.subr.mxu0 0.0
    %1246 = vmatpush1.msra.mxu0 %v1141
    %1247 = vmatprep.subr.mxu0 0.0
    %1248 = vmatpush1.msra.mxu0 %v1142
    %1249 = vmatprep.subr.mxu0 0.0
    %1250 = vmatpush1.msra.mxu0 0.0
    %1251 = vmatprep.subr.mxu0 0.0
    %1252 = vmatpush1.msra.mxu0 0.0
    %1253 = vmatprep.subr.mxu0 0.0
    %1254 = vmatpush1.msra.mxu0 0.0
    %1255 = vmatprep.subr.mxu0 0.0
    %1256 = vmatpush1.msra.mxu0 0.0
    %1257 = vmatprep.subr.mxu0 0.0
    %1258 = vmatpush1.msra.mxu0 0.0
    %1259 = vmatprep.subr.mxu0 0.0
    %1260 = vmatpush1.msra.mxu0 0.0
    %1261 = vmatprep.subr.mxu0 0.0
    %1262 = vmatpush1.msra.mxu0 0.0
    %1263 = vmatprep.subr.mxu0 0.0
    %1264 = vmatpush1.msra.mxu0 0.0
    %1265 = vmatprep.subr.mxu0 0.0
    %1266 = vmatpush1.msra.mxu0 0.0
    %1267 = vmatprep.subr.mxu0 0.0
    %1268 = vmatpush1.msra.mxu0 0.0
    %1269 = vmatprep.subr.mxu0 0.0
    %1270 = vmatpush1.msra.mxu0 0.0
    %1271 = vmatprep.subr.mxu0 0.0
    %1272 = vmatpush1.msra.mxu0 0.0
    %1273 = vmatprep.subr.mxu0 0.0
    %1274 = vmatpush1.msra.mxu0 0.0
    %1275 = vmatprep.subr.mxu0 0.0
    %1276 = vmatpush1.msra.mxu0 0.0
    %1277 = vmatprep.subr.mxu0 0.0
    %1278 = vmatpush1.msra.mxu0 0.0
    %1279 = vmatprep.subr.mxu0 0.0
    %1280 = vmatpush1.msra.mxu0 0.0
    %1281 = vmatprep.subr.mxu0 0.0
    %1282 = vmatpush1.msra.mxu0 0.0
    %1283 = vmatprep.subr.mxu0 0.0
    %1284 = vmatpush1.msra.mxu0 0.0
    %1285 = vmatprep.subr.mxu0 0.0
    %1286 = vmatpush1.msra.mxu0 0.0
    %1287 = vmatprep.subr.mxu0 0.0
    %1288 = vmatpush1.msra.mxu0 0.0
    %1289 = vmatprep.subr.mxu0 0.0
    %1290 = vmatpush1.msra.mxu0 0.0
    %1291 = vmatprep.subr.mxu0 0.0
    %1292 = vmatpush1.msra.mxu0 0.0
    %1293 = vmatprep.subr.mxu0 0.0
    %1294 = vmatpush1.msra.mxu0 0.0
    %1295 = vmatprep.subr.mxu0 0.0
    %1296 = vmatpush1.msra.mxu0 0.0
    %1297 = vmatprep.subr.mxu0 0.0
    %1298 = vmatpush1.msra.mxu0 0.0
    %1299 = vmatprep.subr.mxu0 0.0
    %1300 = vmatpush1.msra.mxu0 0.0
    %1301 = vmatprep.subr.mxu0 0.0
    %1302 = vmatpush1.msra.mxu0 0.0
    %1303 = vmatprep.subr.mxu0 0.0
    %1304 = vmatpush1.msra.mxu0 0.0
    %1305 = vmatprep.mubr.f32.mxu0 0.0
    %1306 = vmatmul.mubr.f32.gmra.mrb[0].mxu0 %v1239
    %v1307 = vpop.f32.mrb[0].mxu0
    %v1308 = vadd.f32 0.0, %v1307
    %v1309 = vpop.f32.mrb[0].mxu0
    %1310 = vdwg.mxu0
    %v1312 = vrot.slane %v1308, 6
    %v1314 = vadd.f32 %v1131, %v1312
    %v1315 = vmul.f32 %v1314, 0.5
    %v1316 = vtanh.pop %v1315
    %v1317 = vmul.f32 %v1316, 0.5
    %v1318 = vadd.f32 %v1317, 0.5
    %v1319 = vtanh.pop %v1314
    %v1321 = vrot.slane %v1229, 6
    %v1323 = vmul.f32 %v1318, %v1321
    %1325 = vrot.lane.b32.xlu0 %v1319, 64
    %v1326 = vpop.permute.xlu0 %1325
    %v1328 = vmul.f32 %v1318, %v1326
    %1330 = vrot.lane.b32.xlu0 %v1328, 32
    %v1331 = vpop.permute.xlu0 %1330
    %v1333 = vadd.f32 %v1323, %v1331
    %v1334 = vtanh.pop %v1333
    %1336 = vrot.lane.b32.xlu0 %v1334, 64
    %v1337 = vpop.permute.xlu0 %1336
    %v1339 = vmul.f32 %v1318, %v1337
    %v1341 = vrot.slane %v1339, 2
    %1342 = vrot.lane.b32.xlu0 %v1341, 32
    %v1343 = vpop.permute.xlu0 %1342
    %v1344 = vsel %vm185, %v1343, 0
    %1346 = vmatprep.subr.mxu0 0.0
    %1347 = vmatpush1.msra.mxu0 %v1139
    %1348 = vmatprep.subr.mxu0 0.0
    %1349 = vmatpush1.msra.mxu0 %v1140
    %1350 = vmatprep.subr.mxu0 0.0
    %1351 = vmatpush1.msra.mxu0 %v1141
    %1352 = vmatprep.subr.mxu0 0.0
    %1353 = vmatpush1.msra.mxu0 %v1142
    %1354 = vmatprep.subr.mxu0 0.0
    %1355 = vmatpush1.msra.mxu0 0.0
    %1356 = vmatprep.subr.mxu0 0.0
    %1357 = vmatpush1.msra.mxu0 0.0
    %1358 = vmatprep.subr.mxu0 0.0
    %1359 = vmatpush1.msra.mxu0 0.0
    %1360 = vmatprep.subr.mxu0 0.0
    %1361 = vmatpush1.msra.mxu0 0.0
    %1362 = vmatprep.subr.mxu0 0.0
    %1363 = vmatpush1.msra.mxu0 0.0
    %1364 = vmatprep.subr.mxu0 0.0
    %1365 = vmatpush1.msra.mxu0 0.0
    %1366 = vmatprep.subr.mxu0 0.0
    %1367 = vmatpush1.msra.mxu0 0.0
    %1368 = vmatprep.subr.mxu0 0.0
    %1369 = vmatpush1.msra.mxu0 0.0
    %1370 = vmatprep.subr.mxu0 0.0
    %1371 = vmatpush1.msra.mxu0 0.0
    %1372 = vmatprep.subr.mxu0 0.0
    %1373 = vmatpush1.msra.mxu0 0.0
    %1374 = vmatprep.subr.mxu0 0.0
    %1375 = vmatpush1.msra.mxu0 0.0
    %1376 = vmatprep.subr.mxu0 0.0
    %1377 = vmatpush1.msra.mxu0 0.0
    %1378 = vmatprep.subr.mxu0 0.0
    %1379 = vmatpush1.msra.mxu0 0.0
    %1380 = vmatprep.subr.mxu0 0.0
    %1381 = vmatpush1.msra.mxu0 0.0
    %1382 = vmatprep.subr.mxu0 0.0
    %1383 = vmatpush1.msra.mxu0 0.0
    %1384 = vmatprep.subr.mxu0 0.0
    %1385 = vmatpush1.msra.mxu0 0.0
    %1386 = vmatprep.subr.mxu0 0.0
    %1387 = vmatpush1.msra.mxu0 0.0
    %1388 = vmatprep.subr.mxu0 0.0
    %1389 = vmatpush1.msra.mxu0 0.0
    %1390 = vmatprep.subr.mxu0 0.0
    %1391 = vmatpush1.msra.mxu0 0.0
    %1392 = vmatprep.subr.mxu0 0.0
    %1393 = vmatpush1.msra.mxu0 0.0
    %1394 = vmatprep.subr.mxu0 0.0
    %1395 = vmatpush1.msra.mxu0 0.0
    %1396 = vmatprep.subr.mxu0 0.0
    %1397 = vmatpush1.msra.mxu0 0.0
    %1398 = vmatprep.subr.mxu0 0.0
    %1399 = vmatpush1.msra.mxu0 0.0
    %1400 = vmatprep.subr.mxu0 0.0
    %1401 = vmatpush1.msra.mxu0 0.0
    %1402 = vmatprep.subr.mxu0 0.0
    %1403 = vmatpush1.msra.mxu0 0.0
    %1404 = vmatprep.subr.mxu0 0.0
    %1405 = vmatpush1.msra.mxu0 0.0
    %1406 = vmatprep.subr.mxu0 0.0
    %1407 = vmatpush1.msra.mxu0 0.0
    %1408 = vmatprep.subr.mxu0 0.0
    %1409 = vmatpush1.msra.mxu0 0.0
    %1410 = vmatprep.mubr.f32.mxu0 0.0
    %1411 = vmatmul.mubr.f32.gmra.mrb[0].mxu0 %v1344
    %v1412 = vpop.f32.mrb[0].mxu0
    %v1413 = vadd.f32 0.0, %v1412
    %v1414 = vpop.f32.mrb[0].mxu0
    %1415 = vdwg.mxu0
    %v1417 = vrot.slane %v1413, 4
    %v1419 = vadd.f32 %v1131, %v1417
    %v1420 = vmul.f32 %v1419, 0.5
    %v1421 = vtanh.pop %v1420
    %v1422 = vmul.f32 %v1421, 0.5
    %v1423 = vadd.f32 %v1422, 0.5
    %v1424 = vtanh.pop %v1419
    %v1426 = vrot.slane %v1333, 6
    %v1428 = vmul.f32 %v1423, %v1426
    %1430 = vrot.lane.b32.xlu0 %v1424, 64
    %v1431 = vpop.permute.xlu0 %1430
    %v1433 = vmul.f32 %v1423, %v1431
    %1435 = vrot.lane.b32.xlu0 %v1433, 32
    %v1436 = vpop.permute.xlu0 %1435
    %v1438 = vadd.f32 %v1428, %v1436
    %v1439 = vtanh.pop %v1438
    %1441 = vrot.lane.b32.xlu0 %v1439, 64
    %v1442 = vpop.permute.xlu0 %1441
    %v1444 = vmul.f32 %v1423, %v1442
    %v1446 = vrot.slane %v1444, 4
    %1447 = vrot.lane.b32.xlu0 %v1446, 32
    %v1448 = vpop.permute.xlu0 %1447
    %v1449 = vsel %vm185, %v1448, 0
    %1451 = vmatprep.subr.mxu0 0.0
    %1452 = vmatpush1.msra.mxu0 %v1139
    %1453 = vmatprep.subr.mxu0 0.0
    %1454 = vmatpush1.msra.mxu0 %v1140
    %1455 = vmatprep.subr.mxu0 0.0
    %1456 = vmatpush1.msra.mxu0 %v1141
    %1457 = vmatprep.subr.mxu0 0.0
    %1458 = vmatpush1.msra.mxu0 %v1142
    %1459 = vmatprep.subr.mxu0 0.0
    %1460 = vmatpush1.msra.mxu0 0.0
    %1461 = vmatprep.subr.mxu0 0.0
    %1462 = vmatpush1.msra.mxu0 0.0
    %1463 = vmatprep.subr.mxu0 0.0
    %1464 = vmatpush1.msra.mxu0 0.0
    %1465 = vmatprep.subr.mxu0 0.0
    %1466 = vmatpush1.msra.mxu0 0.0
    %1467 = vmatprep.subr.mxu0 0.0
    %1468 = vmatpush1.msra.mxu0 0.0
    %1469 = vmatprep.subr.mxu0 0.0
    %1470 = vmatpush1.msra.mxu0 0.0
    %1471 = vmatprep.subr.mxu0 0.0
    %1472 = vmatpush1.msra.mxu0 0.0
    %1473 = vmatprep.subr.mxu0 0.0
    %1474 = vmatpush1.msra.mxu0 0.0
    %1475 = vmatprep.subr.mxu0 0.0
    %1476 = vmatpush1.msra.mxu0 0.0
    %1477 = vmatprep.subr.mxu0 0.0
    %1478 = vmatpush1.msra.mxu0 0.0
    %1479 = vmatprep.subr.mxu0 0.0
    %1480 = vmatpush1.msra.mxu0 0.0
    %1481 = vmatprep.subr.mxu0 0.0
    %1482 = vmatpush1.msra.mxu0 0.0
    %1483 = vmatprep.subr.mxu0 0.0
    %1484 = vmatpush1.msra.mxu0 0.0
    %1485 = vmatprep.subr.mxu0 0.0
    %1486 = vmatpush1.msra.mxu0 0.0
    %1487 = vmatprep.subr.mxu0 0.0
    %1488 = vmatpush1.msra.mxu0 0.0
    %1489 = vmatprep.subr.mxu0 0.0
    %1490 = vmatpush1.msra.mxu0 0.0
    %1491 = vmatprep.subr.mxu0 0.0
    %1492 = vmatpush1.msra.mxu0 0.0
    %1493 = vmatprep.subr.mxu0 0.0
    %1494 = vmatpush1.msra.mxu0 0.0
    %1495 = vmatprep.subr.mxu0 0.0
    %1496 = vmatpush1.msra.mxu0 0.0
    %1497 = vmatprep.subr.mxu0 0.0
    %1498 = vmatpush1.msra.mxu0 0.0
    %1499 = vmatprep.subr.mxu0 0.0
    %1500 = vmatpush1.msra.mxu0 0.0
    %1501 = vmatprep.subr.mxu0 0.0
    %1502 = vmatpush1.msra.mxu0 0.0
    %1503 = vmatprep.subr.mxu0 0.0
    %1504 = vmatpush1.msra.mxu0 0.0
    %1505 = vmatprep.subr.mxu0 0.0
    %1506 = vmatpush1.msra.mxu0 0.0
    %1507 = vmatprep.subr.mxu0 0.0
    %1508 = vmatpush1.msra.mxu0 0.0
    %1509 = vmatprep.subr.mxu0 0.0
    %1510 = vmatpush1.msra.mxu0 0.0
    %1511 = vmatprep.subr.mxu0 0.0
    %1512 = vmatpush1.msra.mxu0 0.0
    %1513 = vmatprep.subr.mxu0 0.0
    %1514 = vmatpush1.msra.mxu0 0.0
    %1515 = vmatprep.mubr.f32.mxu0 0.0
    %1516 = vmatmul.mubr.f32.gmra.mrb[0].mxu0 %v1449
    %v1517 = vpop.f32.mrb[0].mxu0
    %v1518 = vadd.f32 0.0, %v1517
    %v1519 = vpop.f32.mrb[0].mxu0
    %1520 = vdwg.mxu0
    %v1522 = vrot.slane %v1518, 2
    %v1524 = vadd.f32 %v1131, %v1522
    %v1525 = vmul.f32 %v1524, 0.5
    %v1526 = vtanh.pop %v1525
    %v1527 = vmul.f32 %v1526, 0.5
    %v1528 = vadd.f32 %v1527, 0.5
    %v1529 = vtanh.pop %v1524
    %v1531 = vrot.slane %v1438, 6
    %v1533 = vmul.f32 %v1528, %v1531
    %1535 = vrot.lane.b32.xlu0 %v1529, 64
    %v1536 = vpop.permute.xlu0 %1535
    %v1538 = vmul.f32 %v1528, %v1536
    %1540 = vrot.lane.b32.xlu0 %v1538, 32
    %v1541 = vpop.permute.xlu0 %1540
    %v1543 = vadd.f32 %v1533, %v1541
    %v1544 = vtanh.pop %v1543
    %1546 = vrot.lane.b32.xlu0 %v1544, 64
    %v1547 = vpop.permute.xlu0 %1546
    %v1549 = vmul.f32 %v1528, %v1547
    %v1551 = vrot.slane %v1549, 6
    %1552 = vrot.lane.b32.xlu0 %v1551, 32
    %v1553 = vpop.permute.xlu0 %1552
    %v1554 = vsel %vm185, %v1553, 0
    %1556 = vmatprep.subr.mxu0 0.0
    %1557 = vmatpush1.msra.mxu0 %v1139
    %1558 = vmatprep.subr.mxu0 0.0
    %1559 = vmatpush1.msra.mxu0 %v1140
    %1560 = vmatprep.subr.mxu0 0.0
    %1561 = vmatpush1.msra.mxu0 %v1141
    %1562 = vmatprep.subr.mxu0 0.0
    %1563 = vmatpush1.msra.mxu0 %v1142
    %1564 = vmatprep.subr.mxu0 0.0
    %1565 = vmatpush1.msra.mxu0 0.0
    %1566 = vmatprep.subr.mxu0 0.0
    %1567 = vmatpush1.msra.mxu0 0.0
    %1568 = vmatprep.subr.mxu0 0.0
    %1569 = vmatpush1.msra.mxu0 0.0
    %1570 = vmatprep.subr.mxu0 0.0
    %1571 = vmatpush1.msra.mxu0 0.0
    %1572 = vmatprep.subr.mxu0 0.0
    %1573 = vmatpush1.msra.mxu0 0.0
    %1574 = vmatprep.subr.mxu0 0.0
    %1575 = vmatpush1.msra.mxu0 0.0
    %1576 = vmatprep.subr.mxu0 0.0
    %1577 = vmatpush1.msra.mxu0 0.0
    %1578 = vmatprep.subr.mxu0 0.0
    %1579 = vmatpush1.msra.mxu0 0.0
    %1580 = vmatprep.subr.mxu0 0.0
    %1581 = vmatpush1.msra.mxu0 0.0
    %1582 = vmatprep.subr.mxu0 0.0
    %1583 = vmatpush1.msra.mxu0 0.0
    %1584 = vmatprep.subr.mxu0 0.0
    %1585 = vmatpush1.msra.mxu0 0.0
    %1586 = vmatprep.subr.mxu0 0.0
    %1587 = vmatpush1.msra.mxu0 0.0
    %1588 = vmatprep.subr.mxu0 0.0
    %1589 = vmatpush1.msra.mxu0 0.0
    %1590 = vmatprep.subr.mxu0 0.0
    %1591 = vmatpush1.msra.mxu0 0.0
    %1592 = vmatprep.subr.mxu0 0.0
    %1593 = vmatpush1.msra.mxu0 0.0
    %1594 = vmatprep.subr.mxu0 0.0
    %1595 = vmatpush1.msra.mxu0 0.0
    %1596 = vmatprep.subr.mxu0 0.0
    %1597 = vmatpush1.msra.mxu0 0.0
    %1598 = vmatprep.subr.mxu0 0.0
    %1599 = vmatpush1.msra.mxu0 0.0
    %1600 = vmatprep.subr.mxu0 0.0
    %1601 = vmatpush1.msra.mxu0 0.0
    %1602 = vmatprep.subr.mxu0 0.0
    %1603 = vmatpush1.msra.mxu0 0.0
    %1604 = vmatprep.subr.mxu0 0.0
    %1605 = vmatpush1.msra.mxu0 0.0
    %1606 = vmatprep.subr.mxu0 0.0
    %1607 = vmatpush1.msra.mxu0 0.0
    %1608 = vmatprep.subr.mxu0 0.0
    %1609 = vmatpush1.msra.mxu0 0.0
    %1610 = vmatprep.subr.mxu0 0.0
    %1611 = vmatpush1.msra.mxu0 0.0
    %1612 = vmatprep.subr.mxu0 0.0
    %1613 = vmatpush1.msra.mxu0 0.0
    %1614 = vmatprep.subr.mxu0 0.0
    %1615 = vmatpush1.msra.mxu0 0.0
    %1616 = vmatprep.subr.mxu0 0.0
    %1617 = vmatpush1.msra.mxu0 0.0
    %1618 = vmatprep.subr.mxu0 0.0
    %1619 = vmatpush1.msra.mxu0 0.0
    %1620 = vmatprep.mubr.f32.mxu0 0.0
    %1621 = vmatmul.mubr.f32.gmra.mrb[0].mxu0 %v1554
    %v1622 = vpop.f32.mrb[0].mxu0
    %v1623 = vadd.f32 0.0, %v1622
    %v1624 = vpop.f32.mrb[0].mxu0
    %1625 = vdwg.mxu0
    %v1626 = vadd.f32 %v1136, %v1623
    %v1627 = vmul.f32 %v1626, 0.5
    %v1628 = vtanh.pop %v1627
    %v1629 = vmul.f32 %v1628, 0.5
    %v1630 = vadd.f32 %v1629, 0.5
    %v1631 = vtanh.pop %v1626
    %v1633 = vrot.slane %v1543, 6
    %v1635 = vmul.f32 %v1630, %v1633
    %1637 = vrot.lane.b32.xlu0 %v1631, 64
    %v1638 = vpop.permute.xlu0 %1637
    %v1640 = vmul.f32 %v1630, %v1638
    %1642 = vrot.lane.b32.xlu0 %v1640, 32
    %v1643 = vpop.permute.xlu0 %1642
    %v1645 = vadd.f32 %v1635, %v1643
    %v1646 = vtanh.pop %v1645
    %1648 = vrot.lane.b32.xlu0 %v1646, 64
    %v1649 = vpop.permute.xlu0 %1648
    %v1651 = vmul.f32 %v1630, %v1649
    %1653 = vrot.lane.b32.xlu0 %v1651, 32
    %v1654 = vpop.permute.xlu0 %1653
    %v1655 = vsel %vm185, %v1654, 0
    %1657 = vmatprep.subr.mxu0 0.0
    %1658 = vmatpush1.msra.mxu0 %v1139
    %1659 = vmatprep.subr.mxu0 0.0
    %1660 = vmatpush1.msra.mxu0 %v1140
    %1661 = vmatprep.subr.mxu0 0.0
    %1662 = vmatpush1.msra.mxu0 %v1141
    %1663 = vmatprep.subr.mxu0 0.0
    %1664 = vmatpush1.msra.mxu0 %v1142
    %1665 = vmatprep.subr.mxu0 0.0
    %1666 = vmatpush1.msra.mxu0 0.0
    %1667 = vmatprep.subr.mxu0 0.0
    %1668 = vmatpush1.msra.mxu0 0.0
    %1669 = vmatprep.subr.mxu0 0.0
    %1670 = vmatpush1.msra.mxu0 0.0
    %1671 = vmatprep.subr.mxu0 0.0
    %1672 = vmatpush1.msra.mxu0 0.0
    %1673 = vmatprep.subr.mxu0 0.0
    %1674 = vmatpush1.msra.mxu0 0.0
    %1675 = vmatprep.subr.mxu0 0.0
    %1676 = vmatpush1.msra.mxu0 0.0
    %1677 = vmatprep.subr.mxu0 0.0
    %1678 = vmatpush1.msra.mxu0 0.0
    %1679 = vmatprep.subr.mxu0 0.0
    %1680 = vmatpush1.msra.mxu0 0.0
    %1681 = vmatprep.subr.mxu0 0.0
    %1682 = vmatpush1.msra.mxu0 0.0
    %1683 = vmatprep.subr.mxu0 0.0
    %1684 = vmatpush1.msra.mxu0 0.0
    %1685 = vmatprep.subr.mxu0 0.0
    %1686 = vmatpush1.msra.mxu0 0.0
    %1687 = vmatprep.subr.mxu0 0.0
    %1688 = vmatpush1.msra.mxu0 0.0
    %1689 = vmatprep.subr.mxu0 0.0
    %1690 = vmatpush1.msra.mxu0 0.0
    %1691 = vmatprep.subr.mxu0 0.0
    %1692 = vmatpush1.msra.mxu0 0.0
    %1693 = vmatprep.subr.mxu0 0.0
    %1694 = vmatpush1.msra.mxu0 0.0
    %1695 = vmatprep.subr.mxu0 0.0
    %1696 = vmatpush1.msra.mxu0 0.0
    %1697 = vmatprep.subr.mxu0 0.0
    %1698 = vmatpush1.msra.mxu0 0.0
    %1699 = vmatprep.subr.mxu0 0.0
    %1700 = vmatpush1.msra.mxu0 0.0
    %1701 = vmatprep.subr.mxu0 0.0
    %1702 = vmatpush1.msra.mxu0 0.0
    %1703 = vmatprep.subr.mxu0 0.0
    %1704 = vmatpush1.msra.mxu0 0.0
    %1705 = vmatprep.subr.mxu0 0.0
    %1706 = vmatpush1.msra.mxu0 0.0
    %1707 = vmatprep.subr.mxu0 0.0
    %1708 = vmatpush1.msra.mxu0 0.0
    %1709 = vmatprep.subr.mxu0 0.0
    %1710 = vmatpush1.msra.mxu0 0.0
    %1711 = vmatprep.subr.mxu0 0.0
    %1712 = vmatpush1.msra.mxu0 0.0
    %1713 = vmatprep.subr.mxu0 0.0
    %1714 = vmatpush1.msra.mxu0 0.0
    %1715 = vmatprep.subr.mxu0 0.0
    %1716 = vmatpush1.msra.mxu0 0.0
    %1717 = vmatprep.subr.mxu0 0.0
    %1718 = vmatpush1.msra.mxu0 0.0
    %1719 = vmatprep.subr.mxu0 0.0
    %1720 = vmatpush1.msra.mxu0 0.0
    %1721 = vmatprep.mubr.f32.mxu0 0.0
    %1722 = vmatmul.mubr.f32.gmra.mrb[0].mxu0 %v1655
    %v1723 = vpop.f32.mrb[0].mxu0
    %v1724 = vadd.f32 0.0, %v1723
    %v1725 = vpop.f32.mrb[0].mxu0
    %1726 = vdwg.mxu0
    %v1728 = vrot.slane %v1724, 6
    %v1730 = vadd.f32 %v1136, %v1728
    %v1731 = vmul.f32 %v1730, 0.5
    %v1732 = vtanh.pop %v1731
    %v1733 = vmul.f32 %v1732, 0.5
    %v1734 = vadd.f32 %v1733, 0.5
    %v1735 = vtanh.pop %v1730
    %v1737 = vrot.slane %v1645, 6
    %v1739 = vmul.f32 %v1734, %v1737
    %1741 = vrot.lane.b32.xlu0 %v1735, 64
    %v1742 = vpop.permute.xlu0 %1741
    %v1744 = vmul.f32 %v1734, %v1742
    %1746 = vrot.lane.b32.xlu0 %v1744, 32
    %v1747 = vpop.permute.xlu0 %1746
    %v1749 = vadd.f32 %v1739, %v1747
    %v1750 = vtanh.pop %v1749
    %1752 = vrot.lane.b32.xlu0 %v1750, 64
    %v1753 = vpop.permute.xlu0 %1752
    %v1755 = vmul.f32 %v1734, %v1753
    %v1757 = vrot.slane %v1755, 2
    %1758 = vrot.lane.b32.xlu0 %v1757, 32
    %v1759 = vpop.permute.xlu0 %1758
    %v1760 = vsel %vm185, %v1759, 0
    %1762 = vmatprep.subr.mxu0 0.0
    %1763 = vmatpush1.msra.mxu0 %v1139
    %1764 = vmatprep.subr.mxu0 0.0
    %1765 = vmatpush1.msra.mxu0 %v1140
    %1766 = vmatprep.subr.mxu0 0.0
    %1767 = vmatpush1.msra.mxu0 %v1141
    %1768 = vmatprep.subr.mxu0 0.0
    %1769 = vmatpush1.msra.mxu0 %v1142
    %1770 = vmatprep.subr.mxu0 0.0
    %1771 = vmatpush1.msra.mxu0 0.0
    %1772 = vmatprep.subr.mxu0 0.0
    %1773 = vmatpush1.msra.mxu0 0.0
    %1774 = vmatprep.subr.mxu0 0.0
    %1775 = vmatpush1.msra.mxu0 0.0
    %1776 = vmatprep.subr.mxu0 0.0
    %1777 = vmatpush1.msra.mxu0 0.0
    %1778 = vmatprep.subr.mxu0 0.0
    %1779 = vmatpush1.msra.mxu0 0.0
    %1780 = vmatprep.subr.mxu0 0.0
    %1781 = vmatpush1.msra.mxu0 0.0
    %1782 = vmatprep.subr.mxu0 0.0
    %1783 = vmatpush1.msra.mxu0 0.0
    %1784 = vmatprep.subr.mxu0 0.0
    %1785 = vmatpush1.msra.mxu0 0.0
    %1786 = vmatprep.subr.mxu0 0.0
    %1787 = vmatpush1.msra.mxu0 0.0
    %1788 = vmatprep.subr.mxu0 0.0
    %1789 = vmatpush1.msra.mxu0 0.0
    %1790 = vmatprep.subr.mxu0 0.0
    %1791 = vmatpush1.msra.mxu0 0.0
    %1792 = vmatprep.subr.mxu0 0.0
    %1793 = vmatpush1.msra.mxu0 0.0
    %1794 = vmatprep.subr.mxu0 0.0
    %1795 = vmatpush1.msra.mxu0 0.0
    %1796 = vmatprep.subr.mxu0 0.0
    %1797 = vmatpush1.msra.mxu0 0.0
    %1798 = vmatprep.subr.mxu0 0.0
    %1799 = vmatpush1.msra.mxu0 0.0
    %1800 = vmatprep.subr.mxu0 0.0
    %1801 = vmatpush1.msra.mxu0 0.0
    %1802 = vmatprep.subr.mxu0 0.0
    %1803 = vmatpush1.msra.mxu0 0.0
    %1804 = vmatprep.subr.mxu0 0.0
    %1805 = vmatpush1.msra.mxu0 0.0
    %1806 = vmatprep.subr.mxu0 0.0
    %1807 = vmatpush1.msra.mxu0 0.0
    %1808 = vmatprep.subr.mxu0 0.0
    %1809 = vmatpush1.msra.mxu0 0.0
    %1810 = vmatprep.subr.mxu0 0.0
    %1811 = vmatpush1.msra.mxu0 0.0
    %1812 = vmatprep.subr.mxu0 0.0
    %1813 = vmatpush1.msra.mxu0 0.0
    %1814 = vmatprep.subr.mxu0 0.0
    %1815 = vmatpush1.msra.mxu0 0.0
    %1816 = vmatprep.subr.mxu0 0.0
    %1817 = vmatpush1.msra.mxu0 0.0
    %1818 = vmatprep.subr.mxu0 0.0
    %1819 = vmatpush1.msra.mxu0 0.0
    %1820 = vmatprep.subr.mxu0 0.0
    %1821 = vmatpush1.msra.mxu0 0.0
    %1822 = vmatprep.subr.mxu0 0.0
    %1823 = vmatpush1.msra.mxu0 0.0
    %1824 = vmatprep.subr.mxu0 0.0
    %1825 = vmatpush1.msra.mxu0 0.0
    %1826 = vmatprep.mubr.f32.mxu0 0.0
    %1827 = vmatmul.mubr.f32.gmra.mrb[0].mxu0 %v1760
    %v1828 = vpop.f32.mrb[0].mxu0
    %v1829 = vadd.f32 0.0, %v1828
    %v1830 = vpop.f32.mrb[0].mxu0
    %1831 = vdwg.mxu0
    %v1833 = vrot.slane %v1829, 4
    %v1835 = vadd.f32 %v1136, %v1833
    %v1836 = vmul.f32 %v1835, 0.5
    %v1837 = vtanh.pop %v1836
    %v1838 = vmul.f32 %v1837, 0.5
    %v1839 = vadd.f32 %v1838, 0.5
    %v1840 = vtanh.pop %v1835
    %v1842 = vrot.slane %v1749, 6
    %v1844 = vmul.f32 %v1839, %v1842
    %1846 = vrot.lane.b32.xlu0 %v1840, 64
    %v1847 = vpop.permute.xlu0 %1846
    %v1849 = vmul.f32 %v1839, %v1847
    %1851 = vrot.lane.b32.xlu0 %v1849, 32
    %v1852 = vpop.permute.xlu0 %1851
    %v1854 = vadd.f32 %v1844, %v1852
    %v1855 = vtanh.pop %v1854
    %1857 = vrot.lane.b32.xlu0 %v1855, 64
    %v1858 = vpop.permute.xlu0 %1857
    %v1860 = vmul.f32 %v1839, %v1858
    %v1862 = vrot.slane %v1860, 4
    %1863 = vrot.lane.b32.xlu0 %v1862, 32
    %v1864 = vpop.permute.xlu0 %1863
    %v1865 = vsel %vm185, %v1864, 0
    %1867 = vmatprep.subr.mxu0 0.0
    %1868 = vmatpush1.msra.mxu0 %v1139
    %1869 = vmatprep.subr.mxu0 0.0
    %1870 = vmatpush1.msra.mxu0 %v1140
    %1871 = vmatprep.subr.mxu0 0.0
    %1872 = vmatpush1.msra.mxu0 %v1141
    %1873 = vmatprep.subr.mxu0 0.0
    %1874 = vmatpush1.msra.mxu0 %v1142
    %1875 = vmatprep.subr.mxu0 0.0
    %1876 = vmatpush1.msra.mxu0 0.0
    %1877 = vmatprep.subr.mxu0 0.0
    %1878 = vmatpush1.msra.mxu0 0.0
    %1879 = vmatprep.subr.mxu0 0.0
    %1880 = vmatpush1.msra.mxu0 0.0
    %1881 = vmatprep.subr.mxu0 0.0
    %1882 = vmatpush1.msra.mxu0 0.0
    %1883 = vmatprep.subr.mxu0 0.0
    %1884 = vmatpush1.msra.mxu0 0.0
    %1885 = vmatprep.subr.mxu0 0.0
    %1886 = vmatpush1.msra.mxu0 0.0
    %1887 = vmatprep.subr.mxu0 0.0
    %1888 = vmatpush1.msra.mxu0 0.0
    %1889 = vmatprep.subr.mxu0 0.0
    %1890 = vmatpush1.msra.mxu0 0.0
    %1891 = vmatprep.subr.mxu0 0.0
    %1892 = vmatpush1.msra.mxu0 0.0
    %1893 = vmatprep.subr.mxu0 0.0
    %1894 = vmatpush1.msra.mxu0 0.0
    %1895 = vmatprep.subr.mxu0 0.0
    %1896 = vmatpush1.msra.mxu0 0.0
    %1897 = vmatprep.subr.mxu0 0.0
    %1898 = vmatpush1.msra.mxu0 0.0
    %1899 = vmatprep.subr.mxu0 0.0
    %1900 = vmatpush1.msra.mxu0 0.0
    %1901 = vmatprep.subr.mxu0 0.0
    %1902 = vmatpush1.msra.mxu0 0.0
    %1903 = vmatprep.subr.mxu0 0.0
    %1904 = vmatpush1.msra.mxu0 0.0
    %1905 = vmatprep.subr.mxu0 0.0
    %1906 = vmatpush1.msra.mxu0 0.0
    %1907 = vmatprep.subr.mxu0 0.0
    %1908 = vmatpush1.msra.mxu0 0.0
    %1909 = vmatprep.subr.mxu0 0.0
    %1910 = vmatpush1.msra.mxu0 0.0
    %1911 = vmatprep.subr.mxu0 0.0
    %1912 = vmatpush1.msra.mxu0 0.0
    %1913 = vmatprep.subr.mxu0 0.0
    %1914 = vmatpush1.msra.mxu0 0.0
    %1915 = vmatprep.subr.mxu0 0.0
    %1916 = vmatpush1.msra.mxu0 0.0
    %1917 = vmatprep.subr.mxu0 0.0
    %1918 = vmatpush1.msra.mxu0 0.0
    %1919 = vmatprep.subr.mxu0 0.0
    %1920 = vmatpush1.msra.mxu0 0.0
    %1921 = vmatprep.subr.mxu0 0.0
    %1922 = vmatpush1.msra.mxu0 0.0
    %1923 = vmatprep.subr.mxu0 0.0
    %1924 = vmatpush1.msra.mxu0 0.0
    %1925 = vmatprep.subr.mxu0 0.0
    %1926 = vmatpush1.msra.mxu0 0.0
    %1927 = vmatprep.subr.mxu0 0.0
    %1928 = vmatpush1.msra.mxu0 0.0
    %1929 = vmatprep.subr.mxu0 0.0
    %1930 = vmatpush1.msra.mxu0 0.0
    %1931 = vmatprep.mubr.f32.mxu0 0.0
    %1932 = vmatmul.mubr.f32.gmra.mrb[0].mxu0 %v1865
    %v1933 = vpop.f32.mrb[0].mxu0
    %v1934 = vadd.f32 0.0, %v1933
    %v1935 = vpop.f32.mrb[0].mxu0
    %1936 = vdwg.mxu0
    %v1938 = vrot.slane %v1934, 2
    %v1940 = vadd.f32 %v1136, %v1938
    %v1941 = vmul.f32 %v1940, 0.5
    %v1942 = vtanh.pop %v1941
    %v1943 = vmul.f32 %v1942, 0.5
    %v1944 = vadd.f32 %v1943, 0.5
    %v1945 = vtanh.pop %v1940
    %v1947 = vrot.slane %v1854, 6
    %v1949 = vmul.f32 %v1944, %v1947
    %1951 = vrot.lane.b32.xlu0 %v1945, 64
    %v1952 = vpop.permute.xlu0 %1951
    %v1954 = vmul.f32 %v1944, %v1952
    %1956 = vrot.lane.b32.xlu0 %v1954, 32
    %v1957 = vpop.permute.xlu0 %1956
    %v1959 = vadd.f32 %v1949, %v1957
    %v1960 = vtanh.pop %v1959
    %1962 = vrot.lane.b32.xlu0 %v1960, 64
    %v1963 = vpop.permute.xlu0 %1962
    %v1965 = vmul.f32 %v1944, %v1963
    %v1966 = vld [vmem:[%s7] sm:$0xff]
    %v1967 = vld [vmem:[%s7 + $0x8] sm:$0xff]
    %v1968 = vld [vmem:[%s7 + $0x10] sm:$0xff]
    %v1969 = vld [vmem:[%s7 + $0x18] sm:$0xff]
    %v1970 = vld [vmem:[%s8] sm:$0x1]
    %v1972 = vlaneseq
    %v1973 = vshrl.u32 %v1972, 7
    %v1974 = vsub.s32 0, %v1973
    %v1975 = vrot.slane %v1970, %v1974
    %v1978 = vrot.slane %v1965, 6
    %1979 = vrot.lane.b32.xlu0 %v1978, 32
    %v1980 = vpop.permute.xlu0 %1979
    %v1981 = vsel %vm185, %v1980, 0
    %1983 = vmatprep.subr.mxu0 0.0
    %1984 = vmatpush1.msra.mxu0 %v1966
    %1985 = vmatprep.subr.mxu0 0.0
    %1986 = vmatpush1.msra.mxu0 %v1967
    %1987 = vmatprep.subr.mxu0 0.0
    %1988 = vmatpush1.msra.mxu0 %v1968
    %1989 = vmatprep.subr.mxu0 0.0
    %1990 = vmatpush1.msra.mxu0 %v1969
    %1991 = vmatprep.subr.mxu0 0.0
    %1992 = vmatpush1.msra.mxu0 0.0
    %1993 = vmatprep.subr.mxu0 0.0
    %1994 = vmatpush1.msra.mxu0 0.0
    %1995 = vmatprep.subr.mxu0 0.0
    %1996 = vmatpush1.msra.mxu0 0.0
    %1997 = vmatprep.subr.mxu0 0.0
    %1998 = vmatpush1.msra.mxu0 0.0
    %1999 = vmatprep.subr.mxu0 0.0
    %2000 = vmatpush1.msra.mxu0 0.0
    %2001 = vmatprep.subr.mxu0 0.0
    %2002 = vmatpush1.msra.mxu0 0.0
    %2003 = vmatprep.subr.mxu0 0.0
    %2004 = vmatpush1.msra.mxu0 0.0
    %2005 = vmatprep.subr.mxu0 0.0
    %2006 = vmatpush1.msra.mxu0 0.0
    %2007 = vmatprep.subr.mxu0 0.0
    %2008 = vmatpush1.msra.mxu0 0.0
    %2009 = vmatprep.subr.mxu0 0.0
    %2010 = vmatpush1.msra.mxu0 0.0
    %2011 = vmatprep.subr.mxu0 0.0
    %2012 = vmatpush1.msra.mxu0 0.0
    %2013 = vmatprep.subr.mxu0 0.0
    %2014 = vmatpush1.msra.mxu0 0.0
    %2015 = vmatprep.subr.mxu0 0.0
    %2016 = vmatpush1.msra.mxu0 0.0
    %2017 = vmatprep.subr.mxu0 0.0
    %2018 = vmatpush1.msra.mxu0 0.0
    %2019 = vmatprep.subr.mxu0 0.0
    %2020 = vmatpush1.msra.mxu0 0.0
    %2021 = vmatprep.subr.mxu0 0.0
    %2022 = vmatpush1.msra.mxu0 0.0
    %2023 = vmatprep.subr.mxu0 0.0
    %2024 = vmatpush1.msra.mxu0 0.0
    %2025 = vmatprep.subr.mxu0 0.0
    %2026 = vmatpush1.msra.mxu0 0.0
    %2027 = vmatprep.subr.mxu0 0.0
    %2028 = vmatpush1.msra.mxu0 0.0
    %2029 = vmatprep.subr.mxu0 0.0
    %2030 = vmatpush1.msra.mxu0 0.0
    %2031 = vmatprep.subr.mxu0 0.0
    %2032 = vmatpush1.msra.mxu0 0.0
    %2033 = vmatprep.subr.mxu0 0.0
    %2034 = vmatpush1.msra.mxu0 0.0
    %2035 = vmatprep.subr.mxu0 0.0
    %2036 = vmatpush1.msra.mxu0 0.0
    %2037 = vmatprep.subr.mxu0 0.0
    %2038 = vmatpush1.msra.mxu0 0.0
    %2039 = vmatprep.subr.mxu0 0.0
    %2040 = vmatpush1.msra.mxu0 0.0
    %2041 = vmatprep.subr.mxu0 0.0
    %2042 = vmatpush1.msra.mxu0 0.0
    %2043 = vmatprep.subr.mxu0 0.0
    %2044 = vmatpush1.msra.mxu0 0.0
    %2045 = vmatprep.subr.mxu0 0.0
    %2046 = vmatpush1.msra.mxu0 0.0
    %2047 = vmatprep.mubr.f32.mxu0 0.0
    %2048 = vmatmul.mubr.f32.gmra.mrb[0].mxu0 %v1981
    %v2049 = vpop.f32.mrb[0].mxu0
    %v2050 = vadd.f32 %v1975, %v2049
    %v2051 = vpop.f32.mrb[0].mxu0
    %2052 = vdwg.mxu0
    %vm2053 = vcmask 58368
    %2054 = vst.msk [vmem:[#allocation11] sm:$0x3] %vm2053, %v2050
    // Predicated region
    $region54: #{tpu_custom_call.1} parent=1 // pred_check
      _
    $region55: #{tpu_custom_call.1} parent=1 // pred_check_branch
      %2056 = sbr.rel (0) target = $region57
    $region56: #{tpu_custom_call.1} parent=1 // pred_region
      %s2058 = ssub.s32 32, 32
      %2059 = vsyncadd [#allocation5], %s2058
      %s2061 = sshll.u32 [#allocation11], 4
      %s2062 = int_to_ptr.vmem [resolvable:$true] %s2061
      %2064 = dma.vmem_to_hbm [thread:$0]  %s2062, 32, %s9, [#allocation5]
    $region57: #{tpu_custom_call.1} parent=1 // pred_fallthru
      _
    // Predicated region
    $region58: #{tpu_custom_call.1} parent=1 // pred_check
      _
    $region59: #{tpu_custom_call.1} parent=1 // pred_check_branch
      %2066 = sbr.rel (0) target = $region61
    $region60: #{tpu_custom_call.1} parent=1 // pred_region
      %2067 = dma.done [#allocation5], 32
    $region61: #{tpu_custom_call.1} parent=1 // pred_fallthru
      _
    %2068 = vsyncpa [#allocation4], 1
    %2069 = vsyncpa [#allocation7], 1
    %2070 = vsyncpa [#allocation10], 1
    %2071 = vsyncpa [#allocation5], 1

</llo_original>
